<compile_context>
chip_gen: v5e
topology: v5e:2x2
jax: 0.10.0
libtpu: 0.0.40
codegen_flags: <defaults>
</compile_context>

<pallas_src>
import functools

import jax
import jax.numpy as jnp
from jax.experimental import pallas as pl
from jax.experimental.pallas import tpu as pltpu

OUT_CH = 128                                   # out_channels of each Conv1d
KS = (2, 4, 6)                                 # kernel sizes
PADS = (1, 2, 3)                               # paddings
MAXPAD = max(PADS)                             # 3
OFFS = tuple(MAXPAD - p for p in PADS)         # per-conv tap offsets: (2, 1, 0)
MAXK = max(o + k for o, k in zip(OFFS, KS))    # 6 fused taps
NCONV = len(KS)
OUT_TOTAL = NCONV * OUT_CH                     # 384


def _conv_feature_kernel(x_ref, w_ref, b_ref, out_ref, xpad_ref, *, bt, seq_len, l_out):
    """One batch tile per grid step.

    x_ref   : (BT, L, C)          unpadded input tile (f32 or bf16)
    w_ref   : (MAXK, C, 384)      fused tap-major conv weights
    b_ref   : (1, 384)            fused bias (f32)
    out_ref : (BT, 384)           lane-dense per-conv max-pooled features (f32)
    xpad_ref: (BT, L+2*MAXPAD, C) VMEM scratch holding the zero-padded input
    """
    # Build the zero-padded copy of x in VMEM.  Re-zeroed every step (cheap: a few
    # vector stores) so correctness does not depend on program_id==0 running on every
    # core when the batch axis is split across TensorCores (v7x megacore).
    xpad_ref[...] = jnp.zeros_like(xpad_ref)
    xpad_ref[:, MAXPAD:MAXPAD + seq_len, :] = x_ref[...]

    rows = []
    for b in range(bt):
        acc = jnp.zeros((l_out, OUT_TOTAL), jnp.float32)
        for kg in range(MAXK):                      # fused conv: 6 shifted matmuls
            win = xpad_ref[b, kg:kg + l_out, :]     # (l_out, C)
            acc = acc + jnp.dot(win, w_ref[kg],
                                preferred_element_type=jnp.float32)
        rows.append(jnp.max(acc, axis=0, keepdims=True))   # temporal max -> (1, 384)
    m = jnp.concatenate(rows, axis=0)               # (BT, 384)
    # bias + ReLU hoisted past the max: max_t relu(a_t + b) == relu(max_t a_t + b)
    out_ref[...] = jnp.maximum(m + b_ref[...], 0.0).astype(out_ref.dtype)


def _combine_params(params, dtype):
    """Fuse the 3 per-conv tap-major weights (K, C, 128) into one (MAXK, C, 384)
    tensor (conv j in lanes [j*128,(j+1)*128), taps shifted by MAXPAD - pad_j),
    plus a fused (1, 384) bias."""
    c = params[0].shape[1]
    w_parts, b_parts = [], []
    for j, (kern, off) in enumerate(zip(KS, OFFS)):
        w = params[2 * j]                                        # (K, C, 128)
        wj = jnp.zeros((MAXK, c, OUT_CH), jnp.float32).at[off:off + kern].set(w)
        w_parts.append(wj)
        b_parts.append(params[2 * j + 1])                        # (1, 128)
    wc = jnp.concatenate(w_parts, axis=2).astype(dtype)          # (MAXK, C, 384)
    bc = jnp.concatenate(b_parts, axis=1).astype(jnp.float32)    # (1, 384)
    return wc, bc


def conv_feature_extractor(x, params, *, block_b=None, compute_dtype=jnp.float32):
    """x: (B, L, C) f32  ->  (B, 3*OUT_CH) f32 (same order as torch.cat)."""
    B, L, C = x.shape
    assert C == params[0].shape[1], "input_dim mismatch"
    l_out = L + 1                              # each conv: L + 2p - K + 1 = L + 1
    Lp = L + 2 * MAXPAD

    # Batch tile.  Default keeps the (8,128) block constraint satisfied:
    #  - bt >= 8 -> divisible by 8;  - bt < 8 -> bt == B == padded batch (full dim).
    bt = block_b if block_b is not None else min(8, B)
    nb = pl.cdiv(B, bt)
    Bp = nb * bt
    if Bp != B:
        x = jnp.pad(x, ((0, Bp - B), (0, 0), (0, 0)))

    wc, bc = _combine_params(params, compute_dtype)
    xc = x.astype(compute_dtype)

    kernel = functools.partial(_conv_feature_kernel, bt=bt, seq_len=L, l_out=l_out)
    out = pl.pallas_call(
        kernel,
        out_shape=jax.ShapeDtypeStruct((Bp, OUT_TOTAL), jnp.float32),
        grid=(nb,),
        in_specs=[
            pl.BlockSpec((bt, L, C), lambda i: (i, 0, 0)),
            pl.BlockSpec((MAXK, C, OUT_TOTAL), lambda i: (0, 0, 0)),
            pl.BlockSpec((1, OUT_TOTAL), lambda i: (0, 0)),
        ],
        out_specs=pl.BlockSpec((bt, OUT_TOTAL), lambda i: (i, 0)),
        scratch_shapes=[pltpu.VMEM((bt, Lp, C), compute_dtype)],
        compiler_params=pltpu.CompilerParams(dimension_semantics=("parallel",)),
    )(xc, wc, bc)
    return out[:B]


def init_params(key, input_dim):
    """Deterministic synthetic weights with the module's shapes.

    PyTorch Conv1d weight is (out=128, in=input_dim, K); stored tap-major as
    (K, input_dim, 128) for the in-kernel matmuls."""
    params = []
    for i, kern in enumerate(KS):
        kw, kb = jax.random.split(jax.random.fold_in(key, i))
        fan_in = input_dim * kern
        scale = 1.0 / jnp.sqrt(jnp.float32(fan_in))
        w = jax.random.uniform(kw, (kern, input_dim, OUT_CH), jnp.float32,
                               minval=-scale, maxval=scale)
        b = jax.random.uniform(kb, (1, OUT_CH), jnp.float32,
                               minval=-scale, maxval=scale)
        params += [w, b]
    return tuple(params)


def reference(x, params):
    """Pure-JAX reference mirroring the PyTorch forward (NCL conv, relu, max, cat)."""
    x_ncl = jnp.transpose(x, (0, 2, 1))               # (B, C, L)  == x.transpose(1,2)
    outs = []
    for j, (kern, pad) in enumerate(zip(KS, PADS)):
        w = params[2 * j]                             # (K, C, O)
        b = params[2 * j + 1][0]                      # (O,)
        w_oik = jnp.transpose(w, (2, 1, 0))           # (O, I, K) like PyTorch
        y = jax.lax.conv_general_dilated(
            x_ncl, w_oik, window_strides=(1,), padding=[(pad, pad)],
            dimension_numbers=("NCH", "OIH", "NCH"),
            precision=jax.lax.Precision.HIGHEST)
        y = y + b[None, :, None]
        y = jnp.maximum(y, 0.0)
        outs.append(jnp.max(y, axis=2))               # (B, O)
    return jnp.concatenate(outs, axis=1)              # (B, 3*O)


if __name__ == "__main__":
    # Small shapes consistent with the module: batch=4, seq=8, input_dim=100.
    B, L, input_dim = 4, 8, 100
    key = jax.random.PRNGKey(0)
    kx, kp = jax.random.split(key)
    x = jax.random.normal(kx, (B, L, input_dim), jnp.float32)
    params = init_params(kp, input_dim)

    ref = reference(x, params)

    # f32 path (all generations)
    out = jax.block_until_ready(conv_feature_extractor(x, params))
    assert out.shape == (B, 3 * OUT_CH), out.shape
    assert jnp.allclose(out, ref, atol=2e-3, rtol=2e-3), \
        float(jnp.max(jnp.abs(out - ref)))

    # bf16 input/weight path (v6e / v7x optimization); f32 accumulation + epilogue.
    out_bf16 = jax.block_until_ready(
        conv_feature_extractor(x, params, compute_dtype=jnp.bfloat16))
    assert out_bf16.shape == (B, 3 * OUT_CH), out_bf16.shape
    assert jnp.allclose(out_bf16, ref, atol=5e-2, rtol=5e-2), \
        float(jnp.max(jnp.abs(out_bf16 - ref)))

    print("KERNEL_OK")
</pallas_src>

<mosaic_0001>
module attributes {stable_mosaic.version = 11 : i64} {
  func.func @_conv_feature_kernel(%arg0: i32, %arg1: memref<4x8x100xf32, #tpu.memory_space<vmem>>, %arg2: memref<6x100x384xf32, #tpu.memory_space<vmem>>, %arg3: memref<1x384xf32, #tpu.memory_space<vmem>>, %arg4: memref<4x384xf32, #tpu.memory_space<vmem>>, %arg5: memref<4x14x100xf32, #tpu.memory_space<vmem>>) attributes {dimension_semantics = [#tpu.dimension_semantics<parallel>], iteration_bounds = array<i64: 1>, scalar_prefetch = 0 : i64, scratch_operands = 1 : i64, tpu.core_type = #tpu.core_type<tc>, window_params = [{transform_indices = @transform_0, window_bounds = array<i64: 4, 8, 100>}, {pipeline_mode = #tpu.pipeline_mode<synchronous>, transform_indices = @transform_1, window_bounds = array<i64: 6, 100, 384>}, {pipeline_mode = #tpu.pipeline_mode<synchronous>, transform_indices = @transform_2, window_bounds = array<i64: 1, 384>}, {transform_indices = @transform_3, window_bounds = array<i64: 4, 384>}]} {
    %cst = arith.constant 0.000000e+00 : f32
    %0 = vector.broadcast %cst : f32 to vector<4x14x100xf32>
    %c0 = arith.constant 0 : index
    %c0_0 = arith.constant 0 : index
    %c0_1 = arith.constant 0 : index
    %1 = vector.load %arg5[%c0, %c0_0, %c0_1] : memref<4x14x100xf32, #tpu.memory_space<vmem>>, vector<4x14x100xf32>
    tpu.vector_store %arg5[%c0, %c0_0, %c0_1], %0 {strides = array<i32>} : memref<4x14x100xf32, #tpu.memory_space<vmem>>, vector<4x14x100xf32>,
    %c0_2 = arith.constant 0 : index
    %c0_3 = arith.constant 0 : index
    %c0_4 = arith.constant 0 : index
    %2 = vector.load %arg1[%c0_2, %c0_3, %c0_4] : memref<4x8x100xf32, #tpu.memory_space<vmem>>, vector<4x8x100xf32>
    %c0_5 = arith.constant 0 : index
    %c3 = arith.constant 3 : index
    %c0_6 = arith.constant 0 : index
    %3 = vector.load %arg5[%c0_5, %c3, %c0_6] : memref<4x14x100xf32, #tpu.memory_space<vmem>>, vector<4x8x100xf32>
    tpu.vector_store %arg5[%c0_5, %c3, %c0_6], %2 {strides = array<i32>} : memref<4x14x100xf32, #tpu.memory_space<vmem>>, vector<4x8x100xf32>,
    %cst_7 = arith.constant 0.000000e+00 : f32
    %4 = vector.broadcast %cst_7 : f32 to vector<9x384xf32>
    %c0_8 = arith.constant 0 : index
    %c0_9 = arith.constant 0 : index
    %c0_10 = arith.constant 0 : index
    %5 = vector.load %arg5[%c0_8, %c0_9, %c0_10] : memref<4x14x100xf32, #tpu.memory_space<vmem>>, vector<1x9x100xf32>
    %6 = vector.shape_cast %5 : vector<1x9x100xf32> to vector<9x100xf32>
    %c0_11 = arith.constant 0 : index
    %c0_12 = arith.constant 0 : index
    %c0_13 = arith.constant 0 : index
    %7 = vector.load %arg2[%c0_11, %c0_12, %c0_13] : memref<6x100x384xf32, #tpu.memory_space<vmem>>, vector<1x100x384xf32>
    %8 = vector.shape_cast %7 : vector<1x100x384xf32> to vector<100x384xf32>
    %cst_14 = arith.constant dense<0.000000e+00> : vector<9x384xf32>
    %9 = tpu.matmul %6, %8, %cst_14 {dimension_numbers = #tpu.dot_dimension_numbers<[1], [0], [0], [1], [0, 0, 1, 1], [], []>} : vector<9x100xf32>, vector<100x384xf32>, vector<9x384xf32> -> vector<9x384xf32>
    %10 = arith.addf %4, %9 : vector<9x384xf32>
    %c0_15 = arith.constant 0 : index
    %c1 = arith.constant 1 : index
    %c0_16 = arith.constant 0 : index
    %11 = vector.load %arg5[%c0_15, %c1, %c0_16] : memref<4x14x100xf32, #tpu.memory_space<vmem>>, vector<1x9x100xf32>
    %12 = vector.shape_cast %11 : vector<1x9x100xf32> to vector<9x100xf32>
    %c1_17 = arith.constant 1 : index
    %c0_18 = arith.constant 0 : index
    %c0_19 = arith.constant 0 : index
    %13 = vector.load %arg2[%c1_17, %c0_18, %c0_19] : memref<6x100x384xf32, #tpu.memory_space<vmem>>, vector<1x100x384xf32>
    %14 = vector.shape_cast %13 : vector<1x100x384xf32> to vector<100x384xf32>
    %cst_20 = arith.constant dense<0.000000e+00> : vector<9x384xf32>
    %15 = tpu.matmul %12, %14, %cst_20 {dimension_numbers = #tpu.dot_dimension_numbers<[1], [0], [0], [1], [0, 0, 1, 1], [], []>} : vector<9x100xf32>, vector<100x384xf32>, vector<9x384xf32> -> vector<9x384xf32>
    %16 = arith.addf %10, %15 : vector<9x384xf32>
    %c0_21 = arith.constant 0 : index
    %c2 = arith.constant 2 : index
    %c0_22 = arith.constant 0 : index
    %17 = vector.load %arg5[%c0_21, %c2, %c0_22] : memref<4x14x100xf32, #tpu.memory_space<vmem>>, vector<1x9x100xf32>
    %18 = vector.shape_cast %17 : vector<1x9x100xf32> to vector<9x100xf32>
    %c2_23 = arith.constant 2 : index
    %c0_24 = arith.constant 0 : index
    %c0_25 = arith.constant 0 : index
    %19 = vector.load %arg2[%c2_23, %c0_24, %c0_25] : memref<6x100x384xf32, #tpu.memory_space<vmem>>, vector<1x100x384xf32>
    %20 = vector.shape_cast %19 : vector<1x100x384xf32> to vector<100x384xf32>
    %cst_26 = arith.constant dense<0.000000e+00> : vector<9x384xf32>
    %21 = tpu.matmul %18, %20, %cst_26 {dimension_numbers = #tpu.dot_dimension_numbers<[1], [0], [0], [1], [0, 0, 1, 1], [], []>} : vector<9x100xf32>, vector<100x384xf32>, vector<9x384xf32> -> vector<9x384xf32>
    %22 = arith.addf %16, %21 : vector<9x384xf32>
    %c0_27 = arith.constant 0 : index
    %c3_28 = arith.constant 3 : index
    %c0_29 = arith.constant 0 : index
    %23 = vector.load %arg5[%c0_27, %c3_28, %c0_29] : memref<4x14x100xf32, #tpu.memory_space<vmem>>, vector<1x9x100xf32>
    %24 = vector.shape_cast %23 : vector<1x9x100xf32> to vector<9x100xf32>
    %c3_30 = arith.constant 3 : index
    %c0_31 = arith.constant 0 : index
    %c0_32 = arith.constant 0 : index
    %25 = vector.load %arg2[%c3_30, %c0_31, %c0_32] : memref<6x100x384xf32, #tpu.memory_space<vmem>>, vector<1x100x384xf32>
    %26 = vector.shape_cast %25 : vector<1x100x384xf32> to vector<100x384xf32>
    %cst_33 = arith.constant dense<0.000000e+00> : vector<9x384xf32>
    %27 = tpu.matmul %24, %26, %cst_33 {dimension_numbers = #tpu.dot_dimension_numbers<[1], [0], [0], [1], [0, 0, 1, 1], [], []>} : vector<9x100xf32>, vector<100x384xf32>, vector<9x384xf32> -> vector<9x384xf32>
    %28 = arith.addf %22, %27 : vector<9x384xf32>
    %c0_34 = arith.constant 0 : index
    %c4 = arith.constant 4 : index
    %c0_35 = arith.constant 0 : index
    %29 = vector.load %arg5[%c0_34, %c4, %c0_35] : memref<4x14x100xf32, #tpu.memory_space<vmem>>, vector<1x9x100xf32>
    %30 = vector.shape_cast %29 : vector<1x9x100xf32> to vector<9x100xf32>
    %c4_36 = arith.constant 4 : index
    %c0_37 = arith.constant 0 : index
    %c0_38 = arith.constant 0 : index
    %31 = vector.load %arg2[%c4_36, %c0_37, %c0_38] : memref<6x100x384xf32, #tpu.memory_space<vmem>>, vector<1x100x384xf32>
    %32 = vector.shape_cast %31 : vector<1x100x384xf32> to vector<100x384xf32>
    %cst_39 = arith.constant dense<0.000000e+00> : vector<9x384xf32>
    %33 = tpu.matmul %30, %32, %cst_39 {dimension_numbers = #tpu.dot_dimension_numbers<[1], [0], [0], [1], [0, 0, 1, 1], [], []>} : vector<9x100xf32>, vector<100x384xf32>, vector<9x384xf32> -> vector<9x384xf32>
    %34 = arith.addf %28, %33 : vector<9x384xf32>
    %c0_40 = arith.constant 0 : index
    %c5 = arith.constant 5 : index
    %c0_41 = arith.constant 0 : index
    %35 = vector.load %arg5[%c0_40, %c5, %c0_41] : memref<4x14x100xf32, #tpu.memory_space<vmem>>, vector<1x9x100xf32>
    %36 = vector.shape_cast %35 : vector<1x9x100xf32> to vector<9x100xf32>
    %c5_42 = arith.constant 5 : index
    %c0_43 = arith.constant 0 : index
    %c0_44 = arith.constant 0 : index
    %37 = vector.load %arg2[%c5_42, %c0_43, %c0_44] : memref<6x100x384xf32, #tpu.memory_space<vmem>>, vector<1x100x384xf32>
    %38 = vector.shape_cast %37 : vector<1x100x384xf32> to vector<100x384xf32>
    %cst_45 = arith.constant dense<0.000000e+00> : vector<9x384xf32>
    %39 = tpu.matmul %36, %38, %cst_45 {dimension_numbers = #tpu.dot_dimension_numbers<[1], [0], [0], [1], [0, 0, 1, 1], [], []>} : vector<9x100xf32>, vector<100x384xf32>, vector<9x384xf32> -> vector<9x384xf32>
    %40 = arith.addf %34, %39 : vector<9x384xf32>
    %cst_46 = arith.constant dense<0xFF800000> : vector<384xf32>
    %41 = vector.multi_reduction <maximumf>, %40, %cst_46 [0] : vector<9x384xf32> to vector<384xf32>
    %42 = vector.shape_cast %41 : vector<384xf32> to vector<1x384xf32>
    %cst_47 = arith.constant 0.000000e+00 : f32
    %43 = vector.broadcast %cst_47 : f32 to vector<9x384xf32>
    %c1_48 = arith.constant 1 : index
    %c0_49 = arith.constant 0 : index
    %c0_50 = arith.constant 0 : index
    %44 = vector.load %arg5[%c1_48, %c0_49, %c0_50] : memref<4x14x100xf32, #tpu.memory_space<vmem>>, vector<1x9x100xf32>
    %45 = vector.shape_cast %44 : vector<1x9x100xf32> to vector<9x100xf32>
    %c0_51 = arith.constant 0 : index
    %c0_52 = arith.constant 0 : index
    %c0_53 = arith.constant 0 : index
    %46 = vector.load %arg2[%c0_51, %c0_52, %c0_53] : memref<6x100x384xf32, #tpu.memory_space<vmem>>, vector<1x100x384xf32>
    %47 = vector.shape_cast %46 : vector<1x100x384xf32> to vector<100x384xf32>
    %cst_54 = arith.constant dense<0.000000e+00> : vector<9x384xf32>
    %48 = tpu.matmul %45, %47, %cst_54 {dimension_numbers = #tpu.dot_dimension_numbers<[1], [0], [0], [1], [0, 0, 1, 1], [], []>} : vector<9x100xf32>, vector<100x384xf32>, vector<9x384xf32> -> vector<9x384xf32>
    %49 = arith.addf %43, %48 : vector<9x384xf32>
    %c1_55 = arith.constant 1 : index
    %c1_56 = arith.constant 1 : index
    %c0_57 = arith.constant 0 : index
    %50 = vector.load %arg5[%c1_55, %c1_56, %c0_57] : memref<4x14x100xf32, #tpu.memory_space<vmem>>, vector<1x9x100xf32>
    %51 = vector.shape_cast %50 : vector<1x9x100xf32> to vector<9x100xf32>
    %c1_58 = arith.constant 1 : index
    %c0_59 = arith.constant 0 : index
    %c0_60 = arith.constant 0 : index
    %52 = vector.load %arg2[%c1_58, %c0_59, %c0_60] : memref<6x100x384xf32, #tpu.memory_space<vmem>>, vector<1x100x384xf32>
    %53 = vector.shape_cast %52 : vector<1x100x384xf32> to vector<100x384xf32>
    %cst_61 = arith.constant dense<0.000000e+00> : vector<9x384xf32>
    %54 = tpu.matmul %51, %53, %cst_61 {dimension_numbers = #tpu.dot_dimension_numbers<[1], [0], [0], [1], [0, 0, 1, 1], [], []>} : vector<9x100xf32>, vector<100x384xf32>, vector<9x384xf32> -> vector<9x384xf32>
    %55 = arith.addf %49, %54 : vector<9x384xf32>
    %c1_62 = arith.constant 1 : index
    %c2_63 = arith.constant 2 : index
    %c0_64 = arith.constant 0 : index
    %56 = vector.load %arg5[%c1_62, %c2_63, %c0_64] : memref<4x14x100xf32, #tpu.memory_space<vmem>>, vector<1x9x100xf32>
    %57 = vector.shape_cast %56 : vector<1x9x100xf32> to vector<9x100xf32>
    %c2_65 = arith.constant 2 : index
    %c0_66 = arith.constant 0 : index
    %c0_67 = arith.constant 0 : index
    %58 = vector.load %arg2[%c2_65, %c0_66, %c0_67] : memref<6x100x384xf32, #tpu.memory_space<vmem>>, vector<1x100x384xf32>
    %59 = vector.shape_cast %58 : vector<1x100x384xf32> to vector<100x384xf32>
    %cst_68 = arith.constant dense<0.000000e+00> : vector<9x384xf32>
    %60 = tpu.matmul %57, %59, %cst_68 {dimension_numbers = #tpu.dot_dimension_numbers<[1], [0], [0], [1], [0, 0, 1, 1], [], []>} : vector<9x100xf32>, vector<100x384xf32>, vector<9x384xf32> -> vector<9x384xf32>
    %61 = arith.addf %55, %60 : vector<9x384xf32>
    %c1_69 = arith.constant 1 : index
    %c3_70 = arith.constant 3 : index
    %c0_71 = arith.constant 0 : index
    %62 = vector.load %arg5[%c1_69, %c3_70, %c0_71] : memref<4x14x100xf32, #tpu.memory_space<vmem>>, vector<1x9x100xf32>
    %63 = vector.shape_cast %62 : vector<1x9x100xf32> to vector<9x100xf32>
    %c3_72 = arith.constant 3 : index
    %c0_73 = arith.constant 0 : index
    %c0_74 = arith.constant 0 : index
    %64 = vector.load %arg2[%c3_72, %c0_73, %c0_74] : memref<6x100x384xf32, #tpu.memory_space<vmem>>, vector<1x100x384xf32>
    %65 = vector.shape_cast %64 : vector<1x100x384xf32> to vector<100x384xf32>
    %cst_75 = arith.constant dense<0.000000e+00> : vector<9x384xf32>
    %66 = tpu.matmul %63, %65, %cst_75 {dimension_numbers = #tpu.dot_dimension_numbers<[1], [0], [0], [1], [0, 0, 1, 1], [], []>} : vector<9x100xf32>, vector<100x384xf32>, vector<9x384xf32> -> vector<9x384xf32>
    %67 = arith.addf %61, %66 : vector<9x384xf32>
    %c1_76 = arith.constant 1 : index
    %c4_77 = arith.constant 4 : index
    %c0_78 = arith.constant 0 : index
    %68 = vector.load %arg5[%c1_76, %c4_77, %c0_78] : memref<4x14x100xf32, #tpu.memory_space<vmem>>, vector<1x9x100xf32>
    %69 = vector.shape_cast %68 : vector<1x9x100xf32> to vector<9x100xf32>
    %c4_79 = arith.constant 4 : index
    %c0_80 = arith.constant 0 : index
    %c0_81 = arith.constant 0 : index
    %70 = vector.load %arg2[%c4_79, %c0_80, %c0_81] : memref<6x100x384xf32, #tpu.memory_space<vmem>>, vector<1x100x384xf32>
    %71 = vector.shape_cast %70 : vector<1x100x384xf32> to vector<100x384xf32>
    %cst_82 = arith.constant dense<0.000000e+00> : vector<9x384xf32>
    %72 = tpu.matmul %69, %71, %cst_82 {dimension_numbers = #tpu.dot_dimension_numbers<[1], [0], [0], [1], [0, 0, 1, 1], [], []>} : vector<9x100xf32>, vector<100x384xf32>, vector<9x384xf32> -> vector<9x384xf32>
    %73 = arith.addf %67, %72 : vector<9x384xf32>
    %c1_83 = arith.constant 1 : index
    %c5_84 = arith.constant 5 : index
    %c0_85 = arith.constant 0 : index
    %74 = vector.load %arg5[%c1_83, %c5_84, %c0_85] : memref<4x14x100xf32, #tpu.memory_space<vmem>>, vector<1x9x100xf32>
    %75 = vector.shape_cast %74 : vector<1x9x100xf32> to vector<9x100xf32>
    %c5_86 = arith.constant 5 : index
    %c0_87 = arith.constant 0 : index
    %c0_88 = arith.constant 0 : index
    %76 = vector.load %arg2[%c5_86, %c0_87, %c0_88] : memref<6x100x384xf32, #tpu.memory_space<vmem>>, vector<1x100x384xf32>
    %77 = vector.shape_cast %76 : vector<1x100x384xf32> to vector<100x384xf32>
    %cst_89 = arith.constant dense<0.000000e+00> : vector<9x384xf32>
    %78 = tpu.matmul %75, %77, %cst_89 {dimension_numbers = #tpu.dot_dimension_numbers<[1], [0], [0], [1], [0, 0, 1, 1], [], []>} : vector<9x100xf32>, vector<100x384xf32>, vector<9x384xf32> -> vector<9x384xf32>
    %79 = arith.addf %73, %78 : vector<9x384xf32>
    %cst_90 = arith.constant dense<0xFF800000> : vector<384xf32>
    %80 = vector.multi_reduction <maximumf>, %79, %cst_90 [0] : vector<9x384xf32> to vector<384xf32>
    %81 = vector.shape_cast %80 : vector<384xf32> to vector<1x384xf32>
    %cst_91 = arith.constant 0.000000e+00 : f32
    %82 = vector.broadcast %cst_91 : f32 to vector<9x384xf32>
    %c2_92 = arith.constant 2 : index
    %c0_93 = arith.constant 0 : index
    %c0_94 = arith.constant 0 : index
    %83 = vector.load %arg5[%c2_92, %c0_93, %c0_94] : memref<4x14x100xf32, #tpu.memory_space<vmem>>, vector<1x9x100xf32>
    %84 = vector.shape_cast %83 : vector<1x9x100xf32> to vector<9x100xf32>
    %c0_95 = arith.constant 0 : index
    %c0_96 = arith.constant 0 : index
    %c0_97 = arith.constant 0 : index
    %85 = vector.load %arg2[%c0_95, %c0_96, %c0_97] : memref<6x100x384xf32, #tpu.memory_space<vmem>>, vector<1x100x384xf32>
    %86 = vector.shape_cast %85 : vector<1x100x384xf32> to vector<100x384xf32>
    %cst_98 = arith.constant dense<0.000000e+00> : vector<9x384xf32>
    %87 = tpu.matmul %84, %86, %cst_98 {dimension_numbers = #tpu.dot_dimension_numbers<[1], [0], [0], [1], [0, 0, 1, 1], [], []>} : vector<9x100xf32>, vector<100x384xf32>, vector<9x384xf32> -> vector<9x384xf32>
    %88 = arith.addf %82, %87 : vector<9x384xf32>
    %c2_99 = arith.constant 2 : index
    %c1_100 = arith.constant 1 : index
    %c0_101 = arith.constant 0 : index
    %89 = vector.load %arg5[%c2_99, %c1_100, %c0_101] : memref<4x14x100xf32, #tpu.memory_space<vmem>>, vector<1x9x100xf32>
    %90 = vector.shape_cast %89 : vector<1x9x100xf32> to vector<9x100xf32>
    %c1_102 = arith.constant 1 : index
    %c0_103 = arith.constant 0 : index
    %c0_104 = arith.constant 0 : index
    %91 = vector.load %arg2[%c1_102, %c0_103, %c0_104] : memref<6x100x384xf32, #tpu.memory_space<vmem>>, vector<1x100x384xf32>
    %92 = vector.shape_cast %91 : vector<1x100x384xf32> to vector<100x384xf32>
    %cst_105 = arith.constant dense<0.000000e+00> : vector<9x384xf32>
    %93 = tpu.matmul %90, %92, %cst_105 {dimension_numbers = #tpu.dot_dimension_numbers<[1], [0], [0], [1], [0, 0, 1, 1], [], []>} : vector<9x100xf32>, vector<100x384xf32>, vector<9x384xf32> -> vector<9x384xf32>
    %94 = arith.addf %88, %93 : vector<9x384xf32>
    %c2_106 = arith.constant 2 : index
    %c2_107 = arith.constant 2 : index
    %c0_108 = arith.constant 0 : index
    %95 = vector.load %arg5[%c2_106, %c2_107, %c0_108] : memref<4x14x100xf32, #tpu.memory_space<vmem>>, vector<1x9x100xf32>
    %96 = vector.shape_cast %95 : vector<1x9x100xf32> to vector<9x100xf32>
    %c2_109 = arith.constant 2 : index
    %c0_110 = arith.constant 0 : index
    %c0_111 = arith.constant 0 : index
    %97 = vector.load %arg2[%c2_109, %c0_110, %c0_111] : memref<6x100x384xf32, #tpu.memory_space<vmem>>, vector<1x100x384xf32>
    %98 = vector.shape_cast %97 : vector<1x100x384xf32> to vector<100x384xf32>
    %cst_112 = arith.constant dense<0.000000e+00> : vector<9x384xf32>
    %99 = tpu.matmul %96, %98, %cst_112 {dimension_numbers = #tpu.dot_dimension_numbers<[1], [0], [0], [1], [0, 0, 1, 1], [], []>} : vector<9x100xf32>, vector<100x384xf32>, vector<9x384xf32> -> vector<9x384xf32>
    %100 = arith.addf %94, %99 : vector<9x384xf32>
    %c2_113 = arith.constant 2 : index
    %c3_114 = arith.constant 3 : index
    %c0_115 = arith.constant 0 : index
    %101 = vector.load %arg5[%c2_113, %c3_114, %c0_115] : memref<4x14x100xf32, #tpu.memory_space<vmem>>, vector<1x9x100xf32>
    %102 = vector.shape_cast %101 : vector<1x9x100xf32> to vector<9x100xf32>
    %c3_116 = arith.constant 3 : index
    %c0_117 = arith.constant 0 : index
    %c0_118 = arith.constant 0 : index
    %103 = vector.load %arg2[%c3_116, %c0_117, %c0_118] : memref<6x100x384xf32, #tpu.memory_space<vmem>>, vector<1x100x384xf32>
    %104 = vector.shape_cast %103 : vector<1x100x384xf32> to vector<100x384xf32>
    %cst_119 = arith.constant dense<0.000000e+00> : vector<9x384xf32>
    %105 = tpu.matmul %102, %104, %cst_119 {dimension_numbers = #tpu.dot_dimension_numbers<[1], [0], [0], [1], [0, 0, 1, 1], [], []>} : vector<9x100xf32>, vector<100x384xf32>, vector<9x384xf32> -> vector<9x384xf32>
    %106 = arith.addf %100, %105 : vector<9x384xf32>
    %c2_120 = arith.constant 2 : index
    %c4_121 = arith.constant 4 : index
    %c0_122 = arith.constant 0 : index
    %107 = vector.load %arg5[%c2_120, %c4_121, %c0_122] : memref<4x14x100xf32, #tpu.memory_space<vmem>>, vector<1x9x100xf32>
    %108 = vector.shape_cast %107 : vector<1x9x100xf32> to vector<9x100xf32>
    %c4_123 = arith.constant 4 : index
    %c0_124 = arith.constant 0 : index
    %c0_125 = arith.constant 0 : index
    %109 = vector.load %arg2[%c4_123, %c0_124, %c0_125] : memref<6x100x384xf32, #tpu.memory_space<vmem>>, vector<1x100x384xf32>
    %110 = vector.shape_cast %109 : vector<1x100x384xf32> to vector<100x384xf32>
    %cst_126 = arith.constant dense<0.000000e+00> : vector<9x384xf32>
    %111 = tpu.matmul %108, %110, %cst_126 {dimension_numbers = #tpu.dot_dimension_numbers<[1], [0], [0], [1], [0, 0, 1, 1], [], []>} : vector<9x100xf32>, vector<100x384xf32>, vector<9x384xf32> -> vector<9x384xf32>
    %112 = arith.addf %106, %111 : vector<9x384xf32>
    %c2_127 = arith.constant 2 : index
    %c5_128 = arith.constant 5 : index
    %c0_129 = arith.constant 0 : index
    %113 = vector.load %arg5[%c2_127, %c5_128, %c0_129] : memref<4x14x100xf32, #tpu.memory_space<vmem>>, vector<1x9x100xf32>
    %114 = vector.shape_cast %113 : vector<1x9x100xf32> to vector<9x100xf32>
    %c5_130 = arith.constant 5 : index
    %c0_131 = arith.constant 0 : index
    %c0_132 = arith.constant 0 : index
    %115 = vector.load %arg2[%c5_130, %c0_131, %c0_132] : memref<6x100x384xf32, #tpu.memory_space<vmem>>, vector<1x100x384xf32>
    %116 = vector.shape_cast %115 : vector<1x100x384xf32> to vector<100x384xf32>
    %cst_133 = arith.constant dense<0.000000e+00> : vector<9x384xf32>
    %117 = tpu.matmul %114, %116, %cst_133 {dimension_numbers = #tpu.dot_dimension_numbers<[1], [0], [0], [1], [0, 0, 1, 1], [], []>} : vector<9x100xf32>, vector<100x384xf32>, vector<9x384xf32> -> vector<9x384xf32>
    %118 = arith.addf %112, %117 : vector<9x384xf32>
    %cst_134 = arith.constant dense<0xFF800000> : vector<384xf32>
    %119 = vector.multi_reduction <maximumf>, %118, %cst_134 [0] : vector<9x384xf32> to vector<384xf32>
    %120 = vector.shape_cast %119 : vector<384xf32> to vector<1x384xf32>
    %cst_135 = arith.constant 0.000000e+00 : f32
    %121 = vector.broadcast %cst_135 : f32 to vector<9x384xf32>
    %c3_136 = arith.constant 3 : index
    %c0_137 = arith.constant 0 : index
    %c0_138 = arith.constant 0 : index
    %122 = vector.load %arg5[%c3_136, %c0_137, %c0_138] : memref<4x14x100xf32, #tpu.memory_space<vmem>>, vector<1x9x100xf32>
    %123 = vector.shape_cast %122 : vector<1x9x100xf32> to vector<9x100xf32>
    %c0_139 = arith.constant 0 : index
    %c0_140 = arith.constant 0 : index
    %c0_141 = arith.constant 0 : index
    %124 = vector.load %arg2[%c0_139, %c0_140, %c0_141] : memref<6x100x384xf32, #tpu.memory_space<vmem>>, vector<1x100x384xf32>
    %125 = vector.shape_cast %124 : vector<1x100x384xf32> to vector<100x384xf32>
    %cst_142 = arith.constant dense<0.000000e+00> : vector<9x384xf32>
    %126 = tpu.matmul %123, %125, %cst_142 {dimension_numbers = #tpu.dot_dimension_numbers<[1], [0], [0], [1], [0, 0, 1, 1], [], []>} : vector<9x100xf32>, vector<100x384xf32>, vector<9x384xf32> -> vector<9x384xf32>
    %127 = arith.addf %121, %126 : vector<9x384xf32>
    %c3_143 = arith.constant 3 : index
    %c1_144 = arith.constant 1 : index
    %c0_145 = arith.constant 0 : index
    %128 = vector.load %arg5[%c3_143, %c1_144, %c0_145] : memref<4x14x100xf32, #tpu.memory_space<vmem>>, vector<1x9x100xf32>
    %129 = vector.shape_cast %128 : vector<1x9x100xf32> to vector<9x100xf32>
    %c1_146 = arith.constant 1 : index
    %c0_147 = arith.constant 0 : index
    %c0_148 = arith.constant 0 : index
    %130 = vector.load %arg2[%c1_146, %c0_147, %c0_148] : memref<6x100x384xf32, #tpu.memory_space<vmem>>, vector<1x100x384xf32>
    %131 = vector.shape_cast %130 : vector<1x100x384xf32> to vector<100x384xf32>
    %cst_149 = arith.constant dense<0.000000e+00> : vector<9x384xf32>
    %132 = tpu.matmul %129, %131, %cst_149 {dimension_numbers = #tpu.dot_dimension_numbers<[1], [0], [0], [1], [0, 0, 1, 1], [], []>} : vector<9x100xf32>, vector<100x384xf32>, vector<9x384xf32> -> vector<9x384xf32>
    %133 = arith.addf %127, %132 : vector<9x384xf32>
    %c3_150 = arith.constant 3 : index
    %c2_151 = arith.constant 2 : index
    %c0_152 = arith.constant 0 : index
    %134 = vector.load %arg5[%c3_150, %c2_151, %c0_152] : memref<4x14x100xf32, #tpu.memory_space<vmem>>, vector<1x9x100xf32>
    %135 = vector.shape_cast %134 : vector<1x9x100xf32> to vector<9x100xf32>
    %c2_153 = arith.constant 2 : index
    %c0_154 = arith.constant 0 : index
    %c0_155 = arith.constant 0 : index
    %136 = vector.load %arg2[%c2_153, %c0_154, %c0_155] : memref<6x100x384xf32, #tpu.memory_space<vmem>>, vector<1x100x384xf32>
    %137 = vector.shape_cast %136 : vector<1x100x384xf32> to vector<100x384xf32>
    %cst_156 = arith.constant dense<0.000000e+00> : vector<9x384xf32>
    %138 = tpu.matmul %135, %137, %cst_156 {dimension_numbers = #tpu.dot_dimension_numbers<[1], [0], [0], [1], [0, 0, 1, 1], [], []>} : vector<9x100xf32>, vector<100x384xf32>, vector<9x384xf32> -> vector<9x384xf32>
    %139 = arith.addf %133, %138 : vector<9x384xf32>
    %c3_157 = arith.constant 3 : index
    %c3_158 = arith.constant 3 : index
    %c0_159 = arith.constant 0 : index
    %140 = vector.load %arg5[%c3_157, %c3_158, %c0_159] : memref<4x14x100xf32, #tpu.memory_space<vmem>>, vector<1x9x100xf32>
    %141 = vector.shape_cast %140 : vector<1x9x100xf32> to vector<9x100xf32>
    %c3_160 = arith.constant 3 : index
    %c0_161 = arith.constant 0 : index
    %c0_162 = arith.constant 0 : index
    %142 = vector.load %arg2[%c3_160, %c0_161, %c0_162] : memref<6x100x384xf32, #tpu.memory_space<vmem>>, vector<1x100x384xf32>
    %143 = vector.shape_cast %142 : vector<1x100x384xf32> to vector<100x384xf32>
    %cst_163 = arith.constant dense<0.000000e+00> : vector<9x384xf32>
    %144 = tpu.matmul %141, %143, %cst_163 {dimension_numbers = #tpu.dot_dimension_numbers<[1], [0], [0], [1], [0, 0, 1, 1], [], []>} : vector<9x100xf32>, vector<100x384xf32>, vector<9x384xf32> -> vector<9x384xf32>
    %145 = arith.addf %139, %144 : vector<9x384xf32>
    %c3_164 = arith.constant 3 : index
    %c4_165 = arith.constant 4 : index
    %c0_166 = arith.constant 0 : index
    %146 = vector.load %arg5[%c3_164, %c4_165, %c0_166] : memref<4x14x100xf32, #tpu.memory_space<vmem>>, vector<1x9x100xf32>
    %147 = vector.shape_cast %146 : vector<1x9x100xf32> to vector<9x100xf32>
    %c4_167 = arith.constant 4 : index
    %c0_168 = arith.constant 0 : index
    %c0_169 = arith.constant 0 : index
    %148 = vector.load %arg2[%c4_167, %c0_168, %c0_169] : memref<6x100x384xf32, #tpu.memory_space<vmem>>, vector<1x100x384xf32>
    %149 = vector.shape_cast %148 : vector<1x100x384xf32> to vector<100x384xf32>
    %cst_170 = arith.constant dense<0.000000e+00> : vector<9x384xf32>
    %150 = tpu.matmul %147, %149, %cst_170 {dimension_numbers = #tpu.dot_dimension_numbers<[1], [0], [0], [1], [0, 0, 1, 1], [], []>} : vector<9x100xf32>, vector<100x384xf32>, vector<9x384xf32> -> vector<9x384xf32>
    %151 = arith.addf %145, %150 : vector<9x384xf32>
    %c3_171 = arith.constant 3 : index
    %c5_172 = arith.constant 5 : index
    %c0_173 = arith.constant 0 : index
    %152 = vector.load %arg5[%c3_171, %c5_172, %c0_173] : memref<4x14x100xf32, #tpu.memory_space<vmem>>, vector<1x9x100xf32>
    %153 = vector.shape_cast %152 : vector<1x9x100xf32> to vector<9x100xf32>
    %c5_174 = arith.constant 5 : index
    %c0_175 = arith.constant 0 : index
    %c0_176 = arith.constant 0 : index
    %154 = vector.load %arg2[%c5_174, %c0_175, %c0_176] : memref<6x100x384xf32, #tpu.memory_space<vmem>>, vector<1x100x384xf32>
    %155 = vector.shape_cast %154 : vector<1x100x384xf32> to vector<100x384xf32>
    %cst_177 = arith.constant dense<0.000000e+00> : vector<9x384xf32>
    %156 = tpu.matmul %153, %155, %cst_177 {dimension_numbers = #tpu.dot_dimension_numbers<[1], [0], [0], [1], [0, 0, 1, 1], [], []>} : vector<9x100xf32>, vector<100x384xf32>, vector<9x384xf32> -> vector<9x384xf32>
    %157 = arith.addf %151, %156 : vector<9x384xf32>
    %cst_178 = arith.constant dense<0xFF800000> : vector<384xf32>
    %158 = vector.multi_reduction <maximumf>, %157, %cst_178 [0] : vector<9x384xf32> to vector<384xf32>
    %159 = vector.shape_cast %158 : vector<384xf32> to vector<1x384xf32>
    %160 = tpu.concatenate %42, %81, %120, %159 in 0 : vector<1x384xf32>, vector<1x384xf32>, vector<1x384xf32>, vector<1x384xf32> -> vector<4x384xf32>
    %c0_179 = arith.constant 0 : index
    %c0_180 = arith.constant 0 : index
    %161 = vector.load %arg3[%c0_179, %c0_180] : memref<1x384xf32, #tpu.memory_space<vmem>>, vector<1x384xf32>
    %162 = vector.broadcast %161 : vector<1x384xf32> to vector<4x384xf32>
    %163 = arith.addf %160, %162 : vector<4x384xf32>
    %cst_181 = arith.constant 0.000000e+00 : f32
    %164 = vector.broadcast %cst_181 : f32 to vector<4x384xf32>
    %165 = arith.maximumf %163, %164 : vector<4x384xf32>
    %c0_182 = arith.constant 0 : index
    %c0_183 = arith.constant 0 : index
    %166 = vector.load %arg4[%c0_182, %c0_183] : memref<4x384xf32, #tpu.memory_space<vmem>>, vector<4x384xf32>
    tpu.vector_store %arg4[%c0_182, %c0_183], %165 {strides = array<i32>} : memref<4x384xf32, #tpu.memory_space<vmem>>, vector<4x384xf32>,
    return
  }
  func.func @transform_0(%arg0: i32) -> (i32, i32, i32) {
    %c0_i32 = arith.constant 0 : i32
    %c0_i32_0 = arith.constant 0 : i32
    %c0_i32_1 = arith.constant 0 : i32
    return %arg0, %c0_i32, %c0_i32_0 : i32, i32, i32
  }
  func.func @transform_1(%arg0: i32) -> (i32, i32, i32) {
    %c0_i32 = arith.constant 0 : i32
    %c0_i32_0 = arith.constant 0 : i32
    %c0_i32_1 = arith.constant 0 : i32
    %c0_i32_2 = arith.constant 0 : i32
    return %c0_i32, %c0_i32_0, %c0_i32_1 : i32, i32, i32
  }
  func.func @transform_2(%arg0: i32) -> (i32, i32) {
    %c0_i32 = arith.constant 0 : i32
    %c0_i32_0 = arith.constant 0 : i32
    %c0_i32_1 = arith.constant 0 : i32
    return %c0_i32, %c0_i32_0 : i32, i32
  }
  func.func @transform_3(%arg0: i32) -> (i32, i32) {
    %c0_i32 = arith.constant 0 : i32
    %c0_i32_0 = arith.constant 0 : i32
    return %arg0, %c0_i32 : i32, i32
  }
}

</mosaic_0001>

<llo_original>
// kernel: tpu_custom_call.1
$region0: #{tpu_custom_call.1}
  #allocation0 [shape = 'u32[]', space=smem, size = 0x4, offset = 0x4, fixed_abs, tag = 'smem constant byte address 0x4 - core index']
  #allocation1 [shape = 'u32[72,128]{1,0:T(1,128)}', space=vmem, size = 0x9000, scoped, tag = 'internal scratch']
  #allocation2 [shape = 'f32[4,14,100]{2,1,0:T(8,128)}', space=vmem, size = 0x8000, scoped, tag = 'scratch operand']
  %s0 = inlined_call_operand.hbm [shape: f32[4,8,100], index: 0, kind: input, shape index: {}]
  %s1 = inlined_call_operand.hbm [shape: f32[6,100,384], index: 1, kind: input, shape index: {}]
  %s2 = inlined_call_operand.hbm [shape: f32[1,384], index: 2, kind: input, shape index: {}]
  %s3 = inlined_call_operand.hbm [shape: f32[4,384], index: 3, kind: output, shape index: {}]
  %s4 = sld [smem:[#allocation0]]
  $region34: #{tpu_custom_call.1} parent=0
    _
  %s6 = ssub.s32 1, %s4
  %s7 = scalar_select 0, %s6, %s4
  $region1: #{tpu_custom_call.1} parent=0
    #allocation3 [shape = 'u8[16384]{0}', space=vmem, size = 0x4000, scoped, tag = 'input window, operand 0, single buffered']
    #allocation4 [shape = 's32[1]{0}', space=sflag, size = 0x4, scoped, tag = 'scoped memory for tpu_custom_call.1']
    #allocation5 [shape = 's32[1]{0}', space=sflag, size = 0x4, scoped, tag = 'scoped memory for tpu_custom_call.1']
    #allocation6 [shape = 'u8[958464]{0}', space=vmem, size = 0xea000, scoped, tag = 'input window, operand 1, single buffered']
    #allocation7 [shape = 's32[1]{0}', space=sflag, size = 0x4, scoped, tag = 'scoped memory for tpu_custom_call.1']
    #allocation8 [shape = 'u8[1536]{0}', space=vmem, size = 0x800, scoped, tag = 'input window, operand 2, single buffered']
    #allocation9 [shape = 'u8[6144]{0}', space=vmem, size = 0x1800, scoped, tag = 'output window, operand 0, single buffered']
    %8 = vsyncpa [#allocation4], 0
    %9 = vsyncpa [#allocation7], 0
    %10 = vsyncpa [#allocation5], 0
    // Predicated region
    $region2: #{tpu_custom_call.1} parent=1 // pred_check
      _
    $region3: #{tpu_custom_call.1} parent=1 // pred_check_branch
      %12 = sbr.rel (0) target = $region5
    $region4: #{tpu_custom_call.1} parent=1 // pred_region
      %14 = vsyncadd [#allocation4], 0
      %s15 = sshll.u32 %s0, 4
      %s16 = int_to_ptr.hbm [resolvable:$true] %s15
      %s17 = sshll.u32 [#allocation3], 4
      %s18 = int_to_ptr.vmem [resolvable:$true] %s17
      %23 = dma.hbm_to_vmem [thread:$0]  %s16, 512, %s18, [#allocation4], 128, 128, 8
    $region5: #{tpu_custom_call.1} parent=1 // pred_fallthru
      _
    // Predicated region
    $region6: #{tpu_custom_call.1} parent=1 // pred_check
      _
    $region7: #{tpu_custom_call.1} parent=1 // pred_check_branch
      %25 = sbr.rel (0) target = $region9
    $region8: #{tpu_custom_call.1} parent=1 // pred_region
      %27 = vsyncadd [#allocation7], 0
      %s28 = sshll.u32 %s1, 4
      %s29 = int_to_ptr.hbm [resolvable:$true] %s28
      %s30 = sshll.u32 [#allocation6], 4
      %s31 = int_to_ptr.vmem [resolvable:$true] %s30
      %36 = dma.hbm_to_vmem [thread:$0]  %s29, 29952, %s31, [#allocation7], 384, 384, 24
    $region9: #{tpu_custom_call.1} parent=1 // pred_fallthru
      _
    // Predicated region
    $region10: #{tpu_custom_call.1} parent=1 // pred_check
      _
    $region11: #{tpu_custom_call.1} parent=1 // pred_check_branch
      %38 = sbr.rel (0) target = $region13
    $region12: #{tpu_custom_call.1} parent=1 // pred_region
      %40 = vsyncadd [#allocation7], 0
      %s42 = sshll.u32 %s2, 4
      %s43 = int_to_ptr.hbm [resolvable:$true] %s42
      %s44 = sshll.u32 [#allocation8], 4
      %s45 = int_to_ptr.vmem [resolvable:$true] %s44
      %47 = dma.hbm_to_vmem [thread:$0]  %s43, 48, %s45, [#allocation7]
    $region13: #{tpu_custom_call.1} parent=1 // pred_fallthru
      _
    // Predicated region
    $region14: #{tpu_custom_call.1} parent=1 // pred_check
      _
    $region15: #{tpu_custom_call.1} parent=1 // pred_check_branch
      %49 = sbr.rel (0) target = $region17
    $region16: #{tpu_custom_call.1} parent=1 // pred_region
      %51 = dma.done [#allocation4], 512
    $region17: #{tpu_custom_call.1} parent=1 // pred_fallthru
      _
    // Predicated region
    $region18: #{tpu_custom_call.1} parent=1 // pred_check
      _
    $region19: #{tpu_custom_call.1} parent=1 // pred_check_branch
      %53 = sbr.rel (0) target = $region21
    $region20: #{tpu_custom_call.1} parent=1 // pred_region
      %55 = dma.done [#allocation7], 29952
    $region21: #{tpu_custom_call.1} parent=1 // pred_fallthru
      _
    // Predicated region
    $region22: #{tpu_custom_call.1} parent=1 // pred_check
      _
    $region23: #{tpu_custom_call.1} parent=1 // pred_check_branch
      %57 = sbr.rel (0) target = $region25
    $region24: #{tpu_custom_call.1} parent=1 // pred_region
      %59 = dma.done [#allocation7], 48
    $region25: #{tpu_custom_call.1} parent=1 // pred_fallthru
      _
    %vm60 = vcmask 818176
    %61 = vst.msk [vmem:[#allocation2] sm:$0xff] %vm60, 0.0
    %vm62 = vcmask 816128
    %63 = vst.msk [vmem:[#allocation2 + $0x8] sm:$0x3f] %vm62, 0.0
    %64 = vst.msk [vmem:[#allocation2 + $0x10] sm:$0xff] %vm60, 0.0
    %65 = vst.msk [vmem:[#allocation2 + $0x18] sm:$0x3f] %vm62, 0.0
    %66 = vst.msk [vmem:[#allocation2 + $0x20] sm:$0xff] %vm60, 0.0
    %67 = vst.msk [vmem:[#allocation2 + $0x28] sm:$0x3f] %vm62, 0.0
    %68 = vst.msk [vmem:[#allocation2 + $0x30] sm:$0xff] %vm60, 0.0
    %69 = vst.msk [vmem:[#allocation2 + $0x38] sm:$0x3f] %vm62, 0.0
    %v70 = vld [vmem:[#allocation3] sm:$0xff]
    %v71 = vld [vmem:[#allocation3 + $0x8] sm:$0xff]
    %v72 = vld [vmem:[#allocation3 + $0x10] sm:$0xff]
    %v73 = vld [vmem:[#allocation3 + $0x18] sm:$0xff]
    %74 = vst.msk [vmem:[#allocation2 + $0x3] sm:$0xff] %vm60, %v70
    %75 = vst.msk [vmem:[#allocation2 + $0x13] sm:$0xff] %vm60, %v71
    %76 = vst.msk [vmem:[#allocation2 + $0x23] sm:$0xff] %vm60, %v72
    %77 = vst.msk [vmem:[#allocation2 + $0x33] sm:$0xff] %vm60, %v73
    %v78 = vld [vmem:[#allocation2] sm:$0xff]
    %v79 = vld [vmem:[#allocation2 + $0x8] sm:$0x1]
    %v80 = vld [vmem:[#allocation6] sm:$0xff]
    %v81 = vld [vmem:[#allocation6 + $0x8] sm:$0xff]
    %v82 = vld [vmem:[#allocation6 + $0x10] sm:$0xff]
    %v83 = vld [vmem:[#allocation6 + $0x18] sm:$0xff]
    %v84 = vld [vmem:[#allocation6 + $0x20] sm:$0xff]
    %v85 = vld [vmem:[#allocation6 + $0x28] sm:$0xff]
    %v86 = vld [vmem:[#allocation6 + $0x30] sm:$0xff]
    %v87 = vld [vmem:[#allocation6 + $0x38] sm:$0xff]
    %v88 = vld [vmem:[#allocation6 + $0x40] sm:$0xff]
    %v89 = vld [vmem:[#allocation6 + $0x48] sm:$0xff]
    %v90 = vld [vmem:[#allocation6 + $0x50] sm:$0xff]
    %v91 = vld [vmem:[#allocation6 + $0x58] sm:$0xff]
    %v92 = vld [vmem:[#allocation6 + $0x60] sm:$0xff]
    %v93 = vld [vmem:[#allocation6 + $0x68] sm:$0xff]
    %v94 = vld [vmem:[#allocation6 + $0x70] sm:$0xff]
    %v95 = vld [vmem:[#allocation6 + $0x78] sm:$0xff]
    %v96 = vld [vmem:[#allocation6 + $0x80] sm:$0xff]
    %v97 = vld [vmem:[#allocation6 + $0x88] sm:$0xff]
    %v98 = vld [vmem:[#allocation6 + $0x90] sm:$0xff]
    %v99 = vld [vmem:[#allocation6 + $0x98] sm:$0xff]
    %v100 = vld [vmem:[#allocation6 + $0xa0] sm:$0xff]
    %v101 = vld [vmem:[#allocation6 + $0xa8] sm:$0xff]
    %v102 = vld [vmem:[#allocation6 + $0xb0] sm:$0xff]
    %v103 = vld [vmem:[#allocation6 + $0xb8] sm:$0xff]
    %v104 = vld [vmem:[#allocation6 + $0xc0] sm:$0xff]
    %v105 = vld [vmem:[#allocation6 + $0xc8] sm:$0xff]
    %v106 = vld [vmem:[#allocation6 + $0xd0] sm:$0xff]
    %v107 = vld [vmem:[#allocation6 + $0xd8] sm:$0xff]
    %v108 = vld [vmem:[#allocation6 + $0xe0] sm:$0xff]
    %v109 = vld [vmem:[#allocation6 + $0xe8] sm:$0xff]
    %v110 = vld [vmem:[#allocation6 + $0xf0] sm:$0xff]
    %v111 = vld [vmem:[#allocation6 + $0xf8] sm:$0xff]
    %v112 = vld [vmem:[#allocation6 + $0x100] sm:$0xff]
    %v113 = vld [vmem:[#allocation6 + $0x108] sm:$0xff]
    %v114 = vld [vmem:[#allocation6 + $0x110] sm:$0xff]
    %v115 = vld [vmem:[#allocation6 + $0x118] sm:$0xff]
    %v116 = vld [vmem:[#allocation6 + $0x120] sm:$0xf]
    %v117 = vld [vmem:[#allocation6 + $0x128] sm:$0xf]
    %v118 = vld [vmem:[#allocation6 + $0x130] sm:$0xf]
    %v119 = vld [vmem:[#allocation2 + $0x1] sm:$0xff]
    %v120 = vld [vmem:[#allocation2 + $0x9] sm:$0x1]
    %s121 = scalar_lea.vmem [#allocation6], 312
    %v122 = vld [vmem:[%s121] sm:$0xff]
    %v123 = vld [vmem:[%s121 + $0x8] sm:$0xff]
    %v124 = vld [vmem:[%s121 + $0x10] sm:$0xff]
    %v125 = vld [vmem:[%s121 + $0x18] sm:$0xff]
    %v126 = vld [vmem:[%s121 + $0x20] sm:$0xff]
    %v127 = vld [vmem:[%s121 + $0x28] sm:$0xff]
    %v128 = vld [vmem:[%s121 + $0x30] sm:$0xff]
    %v129 = vld [vmem:[%s121 + $0x38] sm:$0xff]
    %v130 = vld [vmem:[%s121 + $0x40] sm:$0xff]
    %v131 = vld [vmem:[%s121 + $0x48] sm:$0xff]
    %v132 = vld [vmem:[%s121 + $0x50] sm:$0xff]
    %v133 = vld [vmem:[%s121 + $0x58] sm:$0xff]
    %v134 = vld [vmem:[%s121 + $0x60] sm:$0xff]
    %v135 = vld [vmem:[%s121 + $0x68] sm:$0xff]
    %v136 = vld [vmem:[%s121 + $0x70] sm:$0xff]
    %v137 = vld [vmem:[%s121 + $0x78] sm:$0xff]
    %v138 = vld [vmem:[%s121 + $0x80] sm:$0xff]
    %v139 = vld [vmem:[%s121 + $0x88] sm:$0xff]
    %v140 = vld [vmem:[%s121 + $0x90] sm:$0xff]
    %v141 = vld [vmem:[%s121 + $0x98] sm:$0xff]
    %v142 = vld [vmem:[%s121 + $0xa0] sm:$0xff]
    %v143 = vld [vmem:[%s121 + $0xa8] sm:$0xff]
    %v144 = vld [vmem:[%s121 + $0xb0] sm:$0xff]
    %v145 = vld [vmem:[%s121 + $0xb8] sm:$0xff]
    %v146 = vld [vmem:[%s121 + $0xc0] sm:$0xff]
    %v147 = vld [vmem:[%s121 + $0xc8] sm:$0xff]
    %v148 = vld [vmem:[%s121 + $0xd0] sm:$0xff]
    %v149 = vld [vmem:[%s121 + $0xd8] sm:$0xff]
    %v150 = vld [vmem:[%s121 + $0xe0] sm:$0xff]
    %v151 = vld [vmem:[%s121 + $0xe8] sm:$0xff]
    %v152 = vld [vmem:[%s121 + $0xf0] sm:$0xff]
    %v153 = vld [vmem:[%s121 + $0xf8] sm:$0xff]
    %v154 = vld [vmem:[%s121 + $0x100] sm:$0xff]
    %v155 = vld [vmem:[%s121 + $0x108] sm:$0xff]
    %v156 = vld [vmem:[%s121 + $0x110] sm:$0xff]
    %v157 = vld [vmem:[%s121 + $0x118] sm:$0xff]
    %v158 = vld [vmem:[%s121 + $0x120] sm:$0xf]
    %v159 = vld [vmem:[%s121 + $0x128] sm:$0xf]
    %v160 = vld [vmem:[%s121 + $0x130] sm:$0xf]
    %v162 = vsel %vm60, %v119, 0
    %v165 = vsel %vm60, %v120, 0
    %vm167 = vcmask 1043456
    %v169 = vsel %vm167, %v158, 0
    %v172 = vsel %vm167, %v159, 0
    %v175 = vsel %vm167, %v160, 0
    %177 = vmatpush.msra.mxu0 0.0
    %178 = vmatpush.msra.mxu0 0.0
    %179 = vmatpush.msra.mxu0 0.0
    %180 = vmatpush.msra.mxu0 %v169
    %181 = vmatpush.msra.mxu0 %v155
    %182 = vmatpush.msra.mxu0 %v152
    %183 = vmatpush.msra.mxu0 %v149
    %184 = vmatpush.msra.mxu0 %v146
    %185 = vmatpush.msra.mxu0 %v143
    %186 = vmatpush.msra.mxu0 %v140
    %187 = vmatpush.msra.mxu0 %v137
    %188 = vmatpush.msra.mxu0 %v134
    %189 = vmatpush.msra.mxu0 %v131
    %190 = vmatpush.msra.mxu0 %v128
    %191 = vmatpush.msra.mxu0 %v125
    %192 = vmatpush.msra.mxu0 %v122
    %193 = vmatmul.f32.gmra.mxu0 %v162
    %v194 = vpop.f32.mrf.mxu0
    %v195 = vadd.f32 0.0, %v194
    %196 = vmatmul.f32.gmra.mxu0 %v165
    %v197 = vpop.f32.mrf.mxu0
    %v198 = vadd.f32 0.0, %v197
    %199 = vdwg.mxu0
    %200 = vmatpush.msra.mxu0 0.0
    %201 = vmatpush.msra.mxu0 0.0
    %202 = vmatpush.msra.mxu0 0.0
    %203 = vmatpush.msra.mxu0 %v172
    %204 = vmatpush.msra.mxu0 %v156
    %205 = vmatpush.msra.mxu0 %v153
    %206 = vmatpush.msra.mxu0 %v150
    %207 = vmatpush.msra.mxu0 %v147
    %208 = vmatpush.msra.mxu0 %v144
    %209 = vmatpush.msra.mxu0 %v141
    %210 = vmatpush.msra.mxu0 %v138
    %211 = vmatpush.msra.mxu0 %v135
    %212 = vmatpush.msra.mxu0 %v132
    %213 = vmatpush.msra.mxu0 %v129
    %214 = vmatpush.msra.mxu0 %v126
    %215 = vmatpush.msra.mxu0 %v123
    %216 = vmatmul.f32.gmra.mxu0 %v162
    %v217 = vpop.f32.mrf.mxu0
    %v218 = vadd.f32 0.0, %v217
    %219 = vmatmul.f32.gmra.mxu0 %v165
    %v220 = vpop.f32.mrf.mxu0
    %v221 = vadd.f32 0.0, %v220
    %222 = vdwg.mxu0
    %223 = vmatpush.msra.mxu0 0.0
    %224 = vmatpush.msra.mxu0 0.0
    %225 = vmatpush.msra.mxu0 0.0
    %226 = vmatpush.msra.mxu0 %v175
    %227 = vmatpush.msra.mxu0 %v157
    %228 = vmatpush.msra.mxu0 %v154
    %229 = vmatpush.msra.mxu0 %v151
    %230 = vmatpush.msra.mxu0 %v148
    %231 = vmatpush.msra.mxu0 %v145
    %232 = vmatpush.msra.mxu0 %v142
    %233 = vmatpush.msra.mxu0 %v139
    %234 = vmatpush.msra.mxu0 %v136
    %235 = vmatpush.msra.mxu0 %v133
    %236 = vmatpush.msra.mxu0 %v130
    %237 = vmatpush.msra.mxu0 %v127
    %238 = vmatpush.msra.mxu0 %v124
    %239 = vmatmul.f32.gmra.mxu0 %v162
    %v240 = vpop.f32.mrf.mxu0
    %v241 = vadd.f32 0.0, %v240
    %242 = vmatmul.f32.gmra.mxu0 %v165
    %v243 = vpop.f32.mrf.mxu0
    %v244 = vadd.f32 0.0, %v243
    %245 = vdwg.mxu0
    %v247 = vsel %vm60, %v78, 0
    %v250 = vsel %vm60, %v79, 0
    %v253 = vsel %vm167, %v116, 0
    %v256 = vsel %vm167, %v117, 0
    %v259 = vsel %vm167, %v118, 0
    %261 = vmatpush.msra.mxu0 0.0
    %262 = vmatpush.msra.mxu0 0.0
    %263 = vmatpush.msra.mxu0 0.0
    %264 = vmatpush.msra.mxu0 %v253
    %265 = vmatpush.msra.mxu0 %v113
    %266 = vmatpush.msra.mxu0 %v110
    %267 = vmatpush.msra.mxu0 %v107
    %268 = vmatpush.msra.mxu0 %v104
    %269 = vmatpush.msra.mxu0 %v101
    %270 = vmatpush.msra.mxu0 %v98
    %271 = vmatpush.msra.mxu0 %v95
    %272 = vmatpush.msra.mxu0 %v92
    %273 = vmatpush.msra.mxu0 %v89
    %274 = vmatpush.msra.mxu0 %v86
    %275 = vmatpush.msra.mxu0 %v83
    %276 = vmatpush.msra.mxu0 %v80
    %277 = vmatmul.f32.gmra.mxu0 %v247
    %v278 = vpop.f32.mrf.mxu0
    %v279 = vadd.f32 %v195, %v278
    %280 = vmatmul.f32.gmra.mxu0 %v250
    %v281 = vpop.f32.mrf.mxu0
    %v282 = vadd.f32 %v198, %v281
    %283 = vdwg.mxu0
    %284 = vmatpush.msra.mxu0 0.0
    %285 = vmatpush.msra.mxu0 0.0
    %286 = vmatpush.msra.mxu0 0.0
    %287 = vmatpush.msra.mxu0 %v256
    %288 = vmatpush.msra.mxu0 %v114
    %289 = vmatpush.msra.mxu0 %v111
    %290 = vmatpush.msra.mxu0 %v108
    %291 = vmatpush.msra.mxu0 %v105
    %292 = vmatpush.msra.mxu0 %v102
    %293 = vmatpush.msra.mxu0 %v99
    %294 = vmatpush.msra.mxu0 %v96
    %295 = vmatpush.msra.mxu0 %v93
    %296 = vmatpush.msra.mxu0 %v90
    %297 = vmatpush.msra.mxu0 %v87
    %298 = vmatpush.msra.mxu0 %v84
    %299 = vmatpush.msra.mxu0 %v81
    %300 = vmatmul.f32.gmra.mxu0 %v247
    %v301 = vpop.f32.mrf.mxu0
    %v302 = vadd.f32 %v218, %v301
    %303 = vmatmul.f32.gmra.mxu0 %v250
    %v304 = vpop.f32.mrf.mxu0
    %v305 = vadd.f32 %v221, %v304
    %306 = vdwg.mxu0
    %307 = vmatpush.msra.mxu0 0.0
    %308 = vmatpush.msra.mxu0 0.0
    %309 = vmatpush.msra.mxu0 0.0
    %310 = vmatpush.msra.mxu0 %v259
    %311 = vmatpush.msra.mxu0 %v115
    %312 = vmatpush.msra.mxu0 %v112
    %313 = vmatpush.msra.mxu0 %v109
    %314 = vmatpush.msra.mxu0 %v106
    %315 = vmatpush.msra.mxu0 %v103
    %316 = vmatpush.msra.mxu0 %v100
    %317 = vmatpush.msra.mxu0 %v97
    %318 = vmatpush.msra.mxu0 %v94
    %319 = vmatpush.msra.mxu0 %v91
    %320 = vmatpush.msra.mxu0 %v88
    %321 = vmatpush.msra.mxu0 %v85
    %322 = vmatpush.msra.mxu0 %v82
    %323 = vmatmul.f32.gmra.mxu0 %v247
    %v324 = vpop.f32.mrf.mxu0
    %v325 = vadd.f32 %v241, %v324
    %326 = vmatmul.f32.gmra.mxu0 %v250
    %v327 = vpop.f32.mrf.mxu0
    %v328 = vadd.f32 %v244, %v327
    %329 = vdwg.mxu0
    %v330 = vld [vmem:[#allocation2 + $0x2] sm:$0xff]
    %v331 = vld [vmem:[#allocation2 + $0xa] sm:$0x1]
    %s332 = scalar_lea.vmem [#allocation6], 624
    %v333 = vld [vmem:[%s332] sm:$0xff]
    %v334 = vld [vmem:[%s332 + $0x8] sm:$0xff]
    %v335 = vld [vmem:[%s332 + $0x10] sm:$0xff]
    %v336 = vld [vmem:[%s332 + $0x18] sm:$0xff]
    %v337 = vld [vmem:[%s332 + $0x20] sm:$0xff]
    %v338 = vld [vmem:[%s332 + $0x28] sm:$0xff]
    %v339 = vld [vmem:[%s332 + $0x30] sm:$0xff]
    %v340 = vld [vmem:[%s332 + $0x38] sm:$0xff]
    %v341 = vld [vmem:[%s332 + $0x40] sm:$0xff]
    %v342 = vld [vmem:[%s332 + $0x48] sm:$0xff]
    %v343 = vld [vmem:[%s332 + $0x50] sm:$0xff]
    %v344 = vld [vmem:[%s332 + $0x58] sm:$0xff]
    %v345 = vld [vmem:[%s332 + $0x60] sm:$0xff]
    %v346 = vld [vmem:[%s332 + $0x68] sm:$0xff]
    %v347 = vld [vmem:[%s332 + $0x70] sm:$0xff]
    %v348 = vld [vmem:[%s332 + $0x78] sm:$0xff]
    %v349 = vld [vmem:[%s332 + $0x80] sm:$0xff]
    %v350 = vld [vmem:[%s332 + $0x88] sm:$0xff]
    %v351 = vld [vmem:[%s332 + $0x90] sm:$0xff]
    %v352 = vld [vmem:[%s332 + $0x98] sm:$0xff]
    %v353 = vld [vmem:[%s332 + $0xa0] sm:$0xff]
    %v354 = vld [vmem:[%s332 + $0xa8] sm:$0xff]
    %v355 = vld [vmem:[%s332 + $0xb0] sm:$0xff]
    %v356 = vld [vmem:[%s332 + $0xb8] sm:$0xff]
    %v357 = vld [vmem:[%s332 + $0xc0] sm:$0xff]
    %v358 = vld [vmem:[%s332 + $0xc8] sm:$0xff]
    %v359 = vld [vmem:[%s332 + $0xd0] sm:$0xff]
    %v360 = vld [vmem:[%s332 + $0xd8] sm:$0xff]
    %v361 = vld [vmem:[%s332 + $0xe0] sm:$0xff]
    %v362 = vld [vmem:[%s332 + $0xe8] sm:$0xff]
    %v363 = vld [vmem:[%s332 + $0xf0] sm:$0xff]
    %v364 = vld [vmem:[%s332 + $0xf8] sm:$0xff]
    %v365 = vld [vmem:[%s332 + $0x100] sm:$0xff]
    %v366 = vld [vmem:[%s332 + $0x108] sm:$0xff]
    %v367 = vld [vmem:[%s332 + $0x110] sm:$0xff]
    %v368 = vld [vmem:[%s332 + $0x118] sm:$0xff]
    %v369 = vld [vmem:[%s332 + $0x120] sm:$0xf]
    %v370 = vld [vmem:[%s332 + $0x128] sm:$0xf]
    %v371 = vld [vmem:[%s332 + $0x130] sm:$0xf]
    %v373 = vsel %vm60, %v330, 0
    %v376 = vsel %vm60, %v331, 0
    %v379 = vsel %vm167, %v369, 0
    %v382 = vsel %vm167, %v370, 0
    %v385 = vsel %vm167, %v371, 0
    %387 = vmatpush.msra.mxu0 0.0
    %388 = vmatpush.msra.mxu0 0.0
    %389 = vmatpush.msra.mxu0 0.0
    %390 = vmatpush.msra.mxu0 %v379
    %391 = vmatpush.msra.mxu0 %v366
    %392 = vmatpush.msra.mxu0 %v363
    %393 = vmatpush.msra.mxu0 %v360
    %394 = vmatpush.msra.mxu0 %v357
    %395 = vmatpush.msra.mxu0 %v354
    %396 = vmatpush.msra.mxu0 %v351
    %397 = vmatpush.msra.mxu0 %v348
    %398 = vmatpush.msra.mxu0 %v345
    %399 = vmatpush.msra.mxu0 %v342
    %400 = vmatpush.msra.mxu0 %v339
    %401 = vmatpush.msra.mxu0 %v336
    %402 = vmatpush.msra.mxu0 %v333
    %403 = vmatmul.f32.gmra.mxu0 %v373
    %v404 = vpop.f32.mrf.mxu0
    %v405 = vadd.f32 0.0, %v404
    %406 = vmatmul.f32.gmra.mxu0 %v376
    %v407 = vpop.f32.mrf.mxu0
    %v408 = vadd.f32 0.0, %v407
    %409 = vdwg.mxu0
    %410 = vmatpush.msra.mxu0 0.0
    %411 = vmatpush.msra.mxu0 0.0
    %412 = vmatpush.msra.mxu0 0.0
    %413 = vmatpush.msra.mxu0 %v382
    %414 = vmatpush.msra.mxu0 %v367
    %415 = vmatpush.msra.mxu0 %v364
    %416 = vmatpush.msra.mxu0 %v361
    %417 = vmatpush.msra.mxu0 %v358
    %418 = vmatpush.msra.mxu0 %v355
    %419 = vmatpush.msra.mxu0 %v352
    %420 = vmatpush.msra.mxu0 %v349
    %421 = vmatpush.msra.mxu0 %v346
    %422 = vmatpush.msra.mxu0 %v343
    %423 = vmatpush.msra.mxu0 %v340
    %424 = vmatpush.msra.mxu0 %v337
    %425 = vmatpush.msra.mxu0 %v334
    %426 = vmatmul.f32.gmra.mxu0 %v373
    %v427 = vpop.f32.mrf.mxu0
    %v428 = vadd.f32 0.0, %v427
    %429 = vmatmul.f32.gmra.mxu0 %v376
    %v430 = vpop.f32.mrf.mxu0
    %v431 = vadd.f32 0.0, %v430
    %432 = vdwg.mxu0
    %433 = vmatpush.msra.mxu0 0.0
    %434 = vmatpush.msra.mxu0 0.0
    %435 = vmatpush.msra.mxu0 0.0
    %436 = vmatpush.msra.mxu0 %v385
    %437 = vmatpush.msra.mxu0 %v368
    %438 = vmatpush.msra.mxu0 %v365
    %439 = vmatpush.msra.mxu0 %v362
    %440 = vmatpush.msra.mxu0 %v359
    %441 = vmatpush.msra.mxu0 %v356
    %442 = vmatpush.msra.mxu0 %v353
    %443 = vmatpush.msra.mxu0 %v350
    %444 = vmatpush.msra.mxu0 %v347
    %445 = vmatpush.msra.mxu0 %v344
    %446 = vmatpush.msra.mxu0 %v341
    %447 = vmatpush.msra.mxu0 %v338
    %448 = vmatpush.msra.mxu0 %v335
    %449 = vmatmul.f32.gmra.mxu0 %v373
    %v450 = vpop.f32.mrf.mxu0
    %v451 = vadd.f32 0.0, %v450
    %452 = vmatmul.f32.gmra.mxu0 %v376
    %v453 = vpop.f32.mrf.mxu0
    %v454 = vadd.f32 0.0, %v453
    %455 = vdwg.mxu0
    %v456 = vadd.f32 %v279, %v405
    %v457 = vadd.f32 %v302, %v428
    %v458 = vadd.f32 %v325, %v451
    %v459 = vadd.f32 %v282, %v408
    %v460 = vadd.f32 %v305, %v431
    %v461 = vadd.f32 %v328, %v454
    %v462 = vld [vmem:[#allocation2 + $0x3] sm:$0xff]
    %v463 = vld [vmem:[#allocation2 + $0xb] sm:$0x1]
    %s464 = scalar_lea.vmem [#allocation6], 936
    %v465 = vld [vmem:[%s464] sm:$0xff]
    %v466 = vld [vmem:[%s464 + $0x8] sm:$0xff]
    %v467 = vld [vmem:[%s464 + $0x10] sm:$0xff]
    %v468 = vld [vmem:[%s464 + $0x18] sm:$0xff]
    %v469 = vld [vmem:[%s464 + $0x20] sm:$0xff]
    %v470 = vld [vmem:[%s464 + $0x28] sm:$0xff]
    %v471 = vld [vmem:[%s464 + $0x30] sm:$0xff]
    %v472 = vld [vmem:[%s464 + $0x38] sm:$0xff]
    %v473 = vld [vmem:[%s464 + $0x40] sm:$0xff]
    %v474 = vld [vmem:[%s464 + $0x48] sm:$0xff]
    %v475 = vld [vmem:[%s464 + $0x50] sm:$0xff]
    %v476 = vld [vmem:[%s464 + $0x58] sm:$0xff]
    %v477 = vld [vmem:[%s464 + $0x60] sm:$0xff]
    %v478 = vld [vmem:[%s464 + $0x68] sm:$0xff]
    %v479 = vld [vmem:[%s464 + $0x70] sm:$0xff]
    %v480 = vld [vmem:[%s464 + $0x78] sm:$0xff]
    %v481 = vld [vmem:[%s464 + $0x80] sm:$0xff]
    %v482 = vld [vmem:[%s464 + $0x88] sm:$0xff]
    %v483 = vld [vmem:[%s464 + $0x90] sm:$0xff]
    %v484 = vld [vmem:[%s464 + $0x98] sm:$0xff]
    %v485 = vld [vmem:[%s464 + $0xa0] sm:$0xff]
    %v486 = vld [vmem:[%s464 + $0xa8] sm:$0xff]
    %v487 = vld [vmem:[%s464 + $0xb0] sm:$0xff]
    %v488 = vld [vmem:[%s464 + $0xb8] sm:$0xff]
    %v489 = vld [vmem:[%s464 + $0xc0] sm:$0xff]
    %v490 = vld [vmem:[%s464 + $0xc8] sm:$0xff]
    %v491 = vld [vmem:[%s464 + $0xd0] sm:$0xff]
    %v492 = vld [vmem:[%s464 + $0xd8] sm:$0xff]
    %v493 = vld [vmem:[%s464 + $0xe0] sm:$0xff]
    %v494 = vld [vmem:[%s464 + $0xe8] sm:$0xff]
    %v495 = vld [vmem:[%s464 + $0xf0] sm:$0xff]
    %v496 = vld [vmem:[%s464 + $0xf8] sm:$0xff]
    %v497 = vld [vmem:[%s464 + $0x100] sm:$0xff]
    %v498 = vld [vmem:[%s464 + $0x108] sm:$0xff]
    %v499 = vld [vmem:[%s464 + $0x110] sm:$0xff]
    %v500 = vld [vmem:[%s464 + $0x118] sm:$0xff]
    %v501 = vld [vmem:[%s464 + $0x120] sm:$0xf]
    %v502 = vld [vmem:[%s464 + $0x128] sm:$0xf]
    %v503 = vld [vmem:[%s464 + $0x130] sm:$0xf]
    %v505 = vsel %vm60, %v462, 0
    %v508 = vsel %vm60, %v463, 0
    %v511 = vsel %vm167, %v501, 0
    %v514 = vsel %vm167, %v502, 0
    %v517 = vsel %vm167, %v503, 0
    %519 = vmatpush.msra.mxu0 0.0
    %520 = vmatpush.msra.mxu0 0.0
    %521 = vmatpush.msra.mxu0 0.0
    %522 = vmatpush.msra.mxu0 %v511
    %523 = vmatpush.msra.mxu0 %v498
    %524 = vmatpush.msra.mxu0 %v495
    %525 = vmatpush.msra.mxu0 %v492
    %526 = vmatpush.msra.mxu0 %v489
    %527 = vmatpush.msra.mxu0 %v486
    %528 = vmatpush.msra.mxu0 %v483
    %529 = vmatpush.msra.mxu0 %v480
    %530 = vmatpush.msra.mxu0 %v477
    %531 = vmatpush.msra.mxu0 %v474
    %532 = vmatpush.msra.mxu0 %v471
    %533 = vmatpush.msra.mxu0 %v468
    %534 = vmatpush.msra.mxu0 %v465
    %535 = vmatmul.f32.gmra.mxu0 %v505
    %v536 = vpop.f32.mrf.mxu0
    %v537 = vadd.f32 0.0, %v536
    %538 = vmatmul.f32.gmra.mxu0 %v508
    %v539 = vpop.f32.mrf.mxu0
    %v540 = vadd.f32 0.0, %v539
    %541 = vdwg.mxu0
    %542 = vmatpush.msra.mxu0 0.0
    %543 = vmatpush.msra.mxu0 0.0
    %544 = vmatpush.msra.mxu0 0.0
    %545 = vmatpush.msra.mxu0 %v514
    %546 = vmatpush.msra.mxu0 %v499
    %547 = vmatpush.msra.mxu0 %v496
    %548 = vmatpush.msra.mxu0 %v493
    %549 = vmatpush.msra.mxu0 %v490
    %550 = vmatpush.msra.mxu0 %v487
    %551 = vmatpush.msra.mxu0 %v484
    %552 = vmatpush.msra.mxu0 %v481
    %553 = vmatpush.msra.mxu0 %v478
    %554 = vmatpush.msra.mxu0 %v475
    %555 = vmatpush.msra.mxu0 %v472
    %556 = vmatpush.msra.mxu0 %v469
    %557 = vmatpush.msra.mxu0 %v466
    %558 = vmatmul.f32.gmra.mxu0 %v505
    %v559 = vpop.f32.mrf.mxu0
    %v560 = vadd.f32 0.0, %v559
    %561 = vmatmul.f32.gmra.mxu0 %v508
    %v562 = vpop.f32.mrf.mxu0
    %v563 = vadd.f32 0.0, %v562
    %564 = vdwg.mxu0
    %565 = vmatpush.msra.mxu0 0.0
    %566 = vmatpush.msra.mxu0 0.0
    %567 = vmatpush.msra.mxu0 0.0
    %568 = vmatpush.msra.mxu0 %v517
    %569 = vmatpush.msra.mxu0 %v500
    %570 = vmatpush.msra.mxu0 %v497
    %571 = vmatpush.msra.mxu0 %v494
    %572 = vmatpush.msra.mxu0 %v491
    %573 = vmatpush.msra.mxu0 %v488
    %574 = vmatpush.msra.mxu0 %v485
    %575 = vmatpush.msra.mxu0 %v482
    %576 = vmatpush.msra.mxu0 %v479
    %577 = vmatpush.msra.mxu0 %v476
    %578 = vmatpush.msra.mxu0 %v473
    %579 = vmatpush.msra.mxu0 %v470
    %580 = vmatpush.msra.mxu0 %v467
    %581 = vmatmul.f32.gmra.mxu0 %v505
    %v582 = vpop.f32.mrf.mxu0
    %v583 = vadd.f32 0.0, %v582
    %584 = vmatmul.f32.gmra.mxu0 %v508
    %v585 = vpop.f32.mrf.mxu0
    %v586 = vadd.f32 0.0, %v585
    %587 = vdwg.mxu0
    %v588 = vadd.f32 %v456, %v537
    %v589 = vadd.f32 %v457, %v560
    %v590 = vadd.f32 %v458, %v583
    %v591 = vadd.f32 %v459, %v540
    %v592 = vadd.f32 %v460, %v563
    %v593 = vadd.f32 %v461, %v586
    %v594 = vld [vmem:[#allocation2 + $0x4] sm:$0xff]
    %v595 = vld [vmem:[#allocation2 + $0xc] sm:$0x1]
    %s596 = scalar_lea.vmem [#allocation6], 1248
    %v597 = vld [vmem:[%s596] sm:$0xff]
    %v598 = vld [vmem:[%s596 + $0x8] sm:$0xff]
    %v599 = vld [vmem:[%s596 + $0x10] sm:$0xff]
    %v600 = vld [vmem:[%s596 + $0x18] sm:$0xff]
    %v601 = vld [vmem:[%s596 + $0x20] sm:$0xff]
    %v602 = vld [vmem:[%s596 + $0x28] sm:$0xff]
    %v603 = vld [vmem:[%s596 + $0x30] sm:$0xff]
    %v604 = vld [vmem:[%s596 + $0x38] sm:$0xff]
    %v605 = vld [vmem:[%s596 + $0x40] sm:$0xff]
    %v606 = vld [vmem:[%s596 + $0x48] sm:$0xff]
    %v607 = vld [vmem:[%s596 + $0x50] sm:$0xff]
    %v608 = vld [vmem:[%s596 + $0x58] sm:$0xff]
    %v609 = vld [vmem:[%s596 + $0x60] sm:$0xff]
    %v610 = vld [vmem:[%s596 + $0x68] sm:$0xff]
    %v611 = vld [vmem:[%s596 + $0x70] sm:$0xff]
    %v612 = vld [vmem:[%s596 + $0x78] sm:$0xff]
    %v613 = vld [vmem:[%s596 + $0x80] sm:$0xff]
    %v614 = vld [vmem:[%s596 + $0x88] sm:$0xff]
    %v615 = vld [vmem:[%s596 + $0x90] sm:$0xff]
    %v616 = vld [vmem:[%s596 + $0x98] sm:$0xff]
    %v617 = vld [vmem:[%s596 + $0xa0] sm:$0xff]
    %v618 = vld [vmem:[%s596 + $0xa8] sm:$0xff]
    %v619 = vld [vmem:[%s596 + $0xb0] sm:$0xff]
    %v620 = vld [vmem:[%s596 + $0xb8] sm:$0xff]
    %v621 = vld [vmem:[%s596 + $0xc0] sm:$0xff]
    %v622 = vld [vmem:[%s596 + $0xc8] sm:$0xff]
    %v623 = vld [vmem:[%s596 + $0xd0] sm:$0xff]
    %v624 = vld [vmem:[%s596 + $0xd8] sm:$0xff]
    %v625 = vld [vmem:[%s596 + $0xe0] sm:$0xff]
    %v626 = vld [vmem:[%s596 + $0xe8] sm:$0xff]
    %v627 = vld [vmem:[%s596 + $0xf0] sm:$0xff]
    %v628 = vld [vmem:[%s596 + $0xf8] sm:$0xff]
    %v629 = vld [vmem:[%s596 + $0x100] sm:$0xff]
    %v630 = vld [vmem:[%s596 + $0x108] sm:$0xff]
    %v631 = vld [vmem:[%s596 + $0x110] sm:$0xff]
    %v632 = vld [vmem:[%s596 + $0x118] sm:$0xff]
    %v633 = vld [vmem:[%s596 + $0x120] sm:$0xf]
    %v634 = vld [vmem:[%s596 + $0x128] sm:$0xf]
    %v635 = vld [vmem:[%s596 + $0x130] sm:$0xf]
    %v637 = vsel %vm60, %v594, 0
    %v640 = vsel %vm60, %v595, 0
    %v643 = vsel %vm167, %v633, 0
    %v646 = vsel %vm167, %v634, 0
    %v649 = vsel %vm167, %v635, 0
    %651 = vmatpush.msra.mxu0 0.0
    %652 = vmatpush.msra.mxu0 0.0
    %653 = vmatpush.msra.mxu0 0.0
    %654 = vmatpush.msra.mxu0 %v643
    %655 = vmatpush.msra.mxu0 %v630
    %656 = vmatpush.msra.mxu0 %v627
    %657 = vmatpush.msra.mxu0 %v624
    %658 = vmatpush.msra.mxu0 %v621
    %659 = vmatpush.msra.mxu0 %v618
    %660 = vmatpush.msra.mxu0 %v615
    %661 = vmatpush.msra.mxu0 %v612
    %662 = vmatpush.msra.mxu0 %v609
    %663 = vmatpush.msra.mxu0 %v606
    %664 = vmatpush.msra.mxu0 %v603
    %665 = vmatpush.msra.mxu0 %v600
    %666 = vmatpush.msra.mxu0 %v597
    %667 = vmatmul.f32.gmra.mxu0 %v637
    %v668 = vpop.f32.mrf.mxu0
    %v669 = vadd.f32 0.0, %v668
    %670 = vmatmul.f32.gmra.mxu0 %v640
    %v671 = vpop.f32.mrf.mxu0
    %v672 = vadd.f32 0.0, %v671
    %673 = vdwg.mxu0
    %674 = vmatpush.msra.mxu0 0.0
    %675 = vmatpush.msra.mxu0 0.0
    %676 = vmatpush.msra.mxu0 0.0
    %677 = vmatpush.msra.mxu0 %v646
    %678 = vmatpush.msra.mxu0 %v631
    %679 = vmatpush.msra.mxu0 %v628
    %680 = vmatpush.msra.mxu0 %v625
    %681 = vmatpush.msra.mxu0 %v622
    %682 = vmatpush.msra.mxu0 %v619
    %683 = vmatpush.msra.mxu0 %v616
    %684 = vmatpush.msra.mxu0 %v613
    %685 = vmatpush.msra.mxu0 %v610
    %686 = vmatpush.msra.mxu0 %v607
    %687 = vmatpush.msra.mxu0 %v604
    %688 = vmatpush.msra.mxu0 %v601
    %689 = vmatpush.msra.mxu0 %v598
    %690 = vmatmul.f32.gmra.mxu0 %v637
    %v691 = vpop.f32.mrf.mxu0
    %v692 = vadd.f32 0.0, %v691
    %693 = vmatmul.f32.gmra.mxu0 %v640
    %v694 = vpop.f32.mrf.mxu0
    %v695 = vadd.f32 0.0, %v694
    %696 = vdwg.mxu0
    %697 = vmatpush.msra.mxu0 0.0
    %698 = vmatpush.msra.mxu0 0.0
    %699 = vmatpush.msra.mxu0 0.0
    %700 = vmatpush.msra.mxu0 %v649
    %701 = vmatpush.msra.mxu0 %v632
    %702 = vmatpush.msra.mxu0 %v629
    %703 = vmatpush.msra.mxu0 %v626
    %704 = vmatpush.msra.mxu0 %v623
    %705 = vmatpush.msra.mxu0 %v620
    %706 = vmatpush.msra.mxu0 %v617
    %707 = vmatpush.msra.mxu0 %v614
    %708 = vmatpush.msra.mxu0 %v611
    %709 = vmatpush.msra.mxu0 %v608
    %710 = vmatpush.msra.mxu0 %v605
    %711 = vmatpush.msra.mxu0 %v602
    %712 = vmatpush.msra.mxu0 %v599
    %713 = vmatmul.f32.gmra.mxu0 %v637
    %v714 = vpop.f32.mrf.mxu0
    %v715 = vadd.f32 0.0, %v714
    %716 = vmatmul.f32.gmra.mxu0 %v640
    %v717 = vpop.f32.mrf.mxu0
    %v718 = vadd.f32 0.0, %v717
    %719 = vdwg.mxu0
    %v720 = vadd.f32 %v588, %v669
    %v721 = vadd.f32 %v589, %v692
    %v722 = vadd.f32 %v590, %v715
    %v723 = vadd.f32 %v591, %v672
    %v724 = vadd.f32 %v592, %v695
    %v725 = vadd.f32 %v593, %v718
    %v726 = vld [vmem:[#allocation2 + $0x5] sm:$0xff]
    %v727 = vld [vmem:[#allocation2 + $0xd] sm:$0x1]
    %s728 = scalar_lea.vmem [#allocation6], 1560
    %v729 = vld [vmem:[%s728] sm:$0xff]
    %v730 = vld [vmem:[%s728 + $0x8] sm:$0xff]
    %v731 = vld [vmem:[%s728 + $0x10] sm:$0xff]
    %v732 = vld [vmem:[%s728 + $0x18] sm:$0xff]
    %v733 = vld [vmem:[%s728 + $0x20] sm:$0xff]
    %v734 = vld [vmem:[%s728 + $0x28] sm:$0xff]
    %v735 = vld [vmem:[%s728 + $0x30] sm:$0xff]
    %v736 = vld [vmem:[%s728 + $0x38] sm:$0xff]
    %v737 = vld [vmem:[%s728 + $0x40] sm:$0xff]
    %v738 = vld [vmem:[%s728 + $0x48] sm:$0xff]
    %v739 = vld [vmem:[%s728 + $0x50] sm:$0xff]
    %v740 = vld [vmem:[%s728 + $0x58] sm:$0xff]
    %v741 = vld [vmem:[%s728 + $0x60] sm:$0xff]
    %v742 = vld [vmem:[%s728 + $0x68] sm:$0xff]
    %v743 = vld [vmem:[%s728 + $0x70] sm:$0xff]
    %v744 = vld [vmem:[%s728 + $0x78] sm:$0xff]
    %v745 = vld [vmem:[%s728 + $0x80] sm:$0xff]
    %v746 = vld [vmem:[%s728 + $0x88] sm:$0xff]
    %v747 = vld [vmem:[%s728 + $0x90] sm:$0xff]
    %v748 = vld [vmem:[%s728 + $0x98] sm:$0xff]
    %v749 = vld [vmem:[%s728 + $0xa0] sm:$0xff]
    %v750 = vld [vmem:[%s728 + $0xa8] sm:$0xff]
    %v751 = vld [vmem:[%s728 + $0xb0] sm:$0xff]
    %v752 = vld [vmem:[%s728 + $0xb8] sm:$0xff]
    %v753 = vld [vmem:[%s728 + $0xc0] sm:$0xff]
    %v754 = vld [vmem:[%s728 + $0xc8] sm:$0xff]
    %v755 = vld [vmem:[%s728 + $0xd0] sm:$0xff]
    %v756 = vld [vmem:[%s728 + $0xd8] sm:$0xff]
    %v757 = vld [vmem:[%s728 + $0xe0] sm:$0xff]
    %v758 = vld [vmem:[%s728 + $0xe8] sm:$0xff]
    %v759 = vld [vmem:[%s728 + $0xf0] sm:$0xff]
    %v760 = vld [vmem:[%s728 + $0xf8] sm:$0xff]
    %v761 = vld [vmem:[%s728 + $0x100] sm:$0xff]
    %v762 = vld [vmem:[%s728 + $0x108] sm:$0xff]
    %v763 = vld [vmem:[%s728 + $0x110] sm:$0xff]
    %v764 = vld [vmem:[%s728 + $0x118] sm:$0xff]
    %v765 = vld [vmem:[%s728 + $0x120] sm:$0xf]
    %v766 = vld [vmem:[%s728 + $0x128] sm:$0xf]
    %v767 = vld [vmem:[%s728 + $0x130] sm:$0xf]
    %v769 = vsel %vm60, %v726, 0
    %v772 = vsel %vm60, %v727, 0
    %v775 = vsel %vm167, %v765, 0
    %v778 = vsel %vm167, %v766, 0
    %v781 = vsel %vm167, %v767, 0
    %783 = vmatpush.msra.mxu0 0.0
    %784 = vmatpush.msra.mxu0 0.0
    %785 = vmatpush.msra.mxu0 0.0
    %786 = vmatpush.msra.mxu0 %v775
    %787 = vmatpush.msra.mxu0 %v762
    %788 = vmatpush.msra.mxu0 %v759
    %789 = vmatpush.msra.mxu0 %v756
    %790 = vmatpush.msra.mxu0 %v753
    %791 = vmatpush.msra.mxu0 %v750
    %792 = vmatpush.msra.mxu0 %v747
    %793 = vmatpush.msra.mxu0 %v744
    %794 = vmatpush.msra.mxu0 %v741
    %795 = vmatpush.msra.mxu0 %v738
    %796 = vmatpush.msra.mxu0 %v735
    %797 = vmatpush.msra.mxu0 %v732
    %798 = vmatpush.msra.mxu0 %v729
    %799 = vmatmul.f32.gmra.mxu0 %v769
    %v800 = vpop.f32.mrf.mxu0
    %v801 = vadd.f32 0.0, %v800
    %802 = vmatmul.f32.gmra.mxu0 %v772
    %v803 = vpop.f32.mrf.mxu0
    %v804 = vadd.f32 0.0, %v803
    %805 = vdwg.mxu0
    %806 = vmatpush.msra.mxu0 0.0
    %807 = vmatpush.msra.mxu0 0.0
    %808 = vmatpush.msra.mxu0 0.0
    %809 = vmatpush.msra.mxu0 %v778
    %810 = vmatpush.msra.mxu0 %v763
    %811 = vmatpush.msra.mxu0 %v760
    %812 = vmatpush.msra.mxu0 %v757
    %813 = vmatpush.msra.mxu0 %v754
    %814 = vmatpush.msra.mxu0 %v751
    %815 = vmatpush.msra.mxu0 %v748
    %816 = vmatpush.msra.mxu0 %v745
    %817 = vmatpush.msra.mxu0 %v742
    %818 = vmatpush.msra.mxu0 %v739
    %819 = vmatpush.msra.mxu0 %v736
    %820 = vmatpush.msra.mxu0 %v733
    %821 = vmatpush.msra.mxu0 %v730
    %822 = vmatmul.f32.gmra.mxu0 %v769
    %v823 = vpop.f32.mrf.mxu0
    %v824 = vadd.f32 0.0, %v823
    %825 = vmatmul.f32.gmra.mxu0 %v772
    %v826 = vpop.f32.mrf.mxu0
    %v827 = vadd.f32 0.0, %v826
    %828 = vdwg.mxu0
    %829 = vmatpush.msra.mxu0 0.0
    %830 = vmatpush.msra.mxu0 0.0
    %831 = vmatpush.msra.mxu0 0.0
    %832 = vmatpush.msra.mxu0 %v781
    %833 = vmatpush.msra.mxu0 %v764
    %834 = vmatpush.msra.mxu0 %v761
    %835 = vmatpush.msra.mxu0 %v758
    %836 = vmatpush.msra.mxu0 %v755
    %837 = vmatpush.msra.mxu0 %v752
    %838 = vmatpush.msra.mxu0 %v749
    %839 = vmatpush.msra.mxu0 %v746
    %840 = vmatpush.msra.mxu0 %v743
    %841 = vmatpush.msra.mxu0 %v740
    %842 = vmatpush.msra.mxu0 %v737
    %843 = vmatpush.msra.mxu0 %v734
    %844 = vmatpush.msra.mxu0 %v731
    %845 = vmatmul.f32.gmra.mxu0 %v769
    %v846 = vpop.f32.mrf.mxu0
    %v847 = vadd.f32 0.0, %v846
    %848 = vmatmul.f32.gmra.mxu0 %v772
    %v849 = vpop.f32.mrf.mxu0
    %v850 = vadd.f32 0.0, %v849
    %851 = vdwg.mxu0
    %v852 = vadd.f32 %v720, %v801
    %v853 = vadd.f32 %v721, %v824
    %v854 = vadd.f32 %v722, %v847
    %v855 = vadd.f32 %v723, %v804
    %v856 = vadd.f32 %v724, %v827
    %v857 = vadd.f32 %v725, %v850
    %vm858 = vcmask 1040384
    %v859 = vsel %vm858, %v855, -inf
    %v860 = vmax.f32 %v852, %v859
    %v861 = vrot.slane %v860, 4
    %v862 = vmax.f32 %v860, %v861
    %v863 = vrot.slane %v862, 2
    %v864 = vmax.f32 %v862, %v863
    %v865 = vrot.slane %v864, 1
    %v866 = vmax.f32 %v864, %v865
    %v867 = vsel %vm858, %v856, -inf
    %v868 = vmax.f32 %v853, %v867
    %v869 = vrot.slane %v868, 4
    %v870 = vmax.f32 %v868, %v869
    %v871 = vrot.slane %v870, 2
    %v872 = vmax.f32 %v870, %v871
    %v873 = vrot.slane %v872, 1
    %v874 = vmax.f32 %v872, %v873
    %v875 = vsel %vm858, %v857, -inf
    %v876 = vmax.f32 %v854, %v875
    %v877 = vrot.slane %v876, 4
    %v878 = vmax.f32 %v876, %v877
    %v879 = vrot.slane %v878, 2
    %v880 = vmax.f32 %v878, %v879
    %v881 = vrot.slane %v880, 1
    %v882 = vmax.f32 %v880, %v881
    %s883 = scalar_lea.vmem [#allocation2], 16
    %v884 = vld [vmem:[%s883] sm:$0xff]
    %v885 = vld [vmem:[%s883 + $0x8] sm:$0x1]
    %v886 = vld [vmem:[%s883 + $0x1] sm:$0xff]
    %v887 = vld [vmem:[%s883 + $0x9] sm:$0x1]
    %v889 = vsel %vm60, %v886, 0
    %v892 = vsel %vm60, %v887, 0
    %894 = vmatpush.msra.mxu0 0.0
    %895 = vmatpush.msra.mxu0 0.0
    %896 = vmatpush.msra.mxu0 0.0
    %897 = vmatpush.msra.mxu0 %v169
    %898 = vmatpush.msra.mxu0 %v155
    %899 = vmatpush.msra.mxu0 %v152
    %900 = vmatpush.msra.mxu0 %v149
    %901 = vmatpush.msra.mxu0 %v146
    %902 = vmatpush.msra.mxu0 %v143
    %903 = vmatpush.msra.mxu0 %v140
    %904 = vmatpush.msra.mxu0 %v137
    %905 = vmatpush.msra.mxu0 %v134
    %906 = vmatpush.msra.mxu0 %v131
    %907 = vmatpush.msra.mxu0 %v128
    %908 = vmatpush.msra.mxu0 %v125
    %909 = vmatpush.msra.mxu0 %v122
    %910 = vmatmul.f32.gmra.mxu0 %v889
    %v911 = vpop.f32.mrf.mxu0
    %v912 = vadd.f32 0.0, %v911
    %913 = vmatmul.f32.gmra.mxu0 %v892
    %v914 = vpop.f32.mrf.mxu0
    %v915 = vadd.f32 0.0, %v914
    %916 = vdwg.mxu0
    %917 = vmatpush.msra.mxu0 0.0
    %918 = vmatpush.msra.mxu0 0.0
    %919 = vmatpush.msra.mxu0 0.0
    %920 = vmatpush.msra.mxu0 %v172
    %921 = vmatpush.msra.mxu0 %v156
    %922 = vmatpush.msra.mxu0 %v153
    %923 = vmatpush.msra.mxu0 %v150
    %924 = vmatpush.msra.mxu0 %v147
    %925 = vmatpush.msra.mxu0 %v144
    %926 = vmatpush.msra.mxu0 %v141
    %927 = vmatpush.msra.mxu0 %v138
    %928 = vmatpush.msra.mxu0 %v135
    %929 = vmatpush.msra.mxu0 %v132
    %930 = vmatpush.msra.mxu0 %v129
    %931 = vmatpush.msra.mxu0 %v126
    %932 = vmatpush.msra.mxu0 %v123
    %933 = vmatmul.f32.gmra.mxu0 %v889
    %v934 = vpop.f32.mrf.mxu0
    %v935 = vadd.f32 0.0, %v934
    %936 = vmatmul.f32.gmra.mxu0 %v892
    %v937 = vpop.f32.mrf.mxu0
    %v938 = vadd.f32 0.0, %v937
    %939 = vdwg.mxu0
    %940 = vmatpush.msra.mxu0 0.0
    %941 = vmatpush.msra.mxu0 0.0
    %942 = vmatpush.msra.mxu0 0.0
    %943 = vmatpush.msra.mxu0 %v175
    %944 = vmatpush.msra.mxu0 %v157
    %945 = vmatpush.msra.mxu0 %v154
    %946 = vmatpush.msra.mxu0 %v151
    %947 = vmatpush.msra.mxu0 %v148
    %948 = vmatpush.msra.mxu0 %v145
    %949 = vmatpush.msra.mxu0 %v142
    %950 = vmatpush.msra.mxu0 %v139
    %951 = vmatpush.msra.mxu0 %v136
    %952 = vmatpush.msra.mxu0 %v133
    %953 = vmatpush.msra.mxu0 %v130
    %954 = vmatpush.msra.mxu0 %v127
    %955 = vmatpush.msra.mxu0 %v124
    %956 = vmatmul.f32.gmra.mxu0 %v889
    %v957 = vpop.f32.mrf.mxu0
    %v958 = vadd.f32 0.0, %v957
    %959 = vmatmul.f32.gmra.mxu0 %v892
    %v960 = vpop.f32.mrf.mxu0
    %v961 = vadd.f32 0.0, %v960
    %962 = vdwg.mxu0
    %v964 = vsel %vm60, %v884, 0
    %v967 = vsel %vm60, %v885, 0
    %969 = vmatpush.msra.mxu0 0.0
    %970 = vmatpush.msra.mxu0 0.0
    %971 = vmatpush.msra.mxu0 0.0
    %972 = vmatpush.msra.mxu0 %v253
    %973 = vmatpush.msra.mxu0 %v113
    %974 = vmatpush.msra.mxu0 %v110
    %975 = vmatpush.msra.mxu0 %v107
    %976 = vmatpush.msra.mxu0 %v104
    %977 = vmatpush.msra.mxu0 %v101
    %978 = vmatpush.msra.mxu0 %v98
    %979 = vmatpush.msra.mxu0 %v95
    %980 = vmatpush.msra.mxu0 %v92
    %981 = vmatpush.msra.mxu0 %v89
    %982 = vmatpush.msra.mxu0 %v86
    %983 = vmatpush.msra.mxu0 %v83
    %984 = vmatpush.msra.mxu0 %v80
    %985 = vmatmul.f32.gmra.mxu0 %v964
    %v986 = vpop.f32.mrf.mxu0
    %v987 = vadd.f32 %v912, %v986
    %988 = vmatmul.f32.gmra.mxu0 %v967
    %v989 = vpop.f32.mrf.mxu0
    %v990 = vadd.f32 %v915, %v989
    %991 = vdwg.mxu0
    %992 = vmatpush.msra.mxu0 0.0
    %993 = vmatpush.msra.mxu0 0.0
    %994 = vmatpush.msra.mxu0 0.0
    %995 = vmatpush.msra.mxu0 %v256
    %996 = vmatpush.msra.mxu0 %v114
    %997 = vmatpush.msra.mxu0 %v111
    %998 = vmatpush.msra.mxu0 %v108
    %999 = vmatpush.msra.mxu0 %v105
    %1000 = vmatpush.msra.mxu0 %v102
    %1001 = vmatpush.msra.mxu0 %v99
    %1002 = vmatpush.msra.mxu0 %v96
    %1003 = vmatpush.msra.mxu0 %v93
    %1004 = vmatpush.msra.mxu0 %v90
    %1005 = vmatpush.msra.mxu0 %v87
    %1006 = vmatpush.msra.mxu0 %v84
    %1007 = vmatpush.msra.mxu0 %v81
    %1008 = vmatmul.f32.gmra.mxu0 %v964
    %v1009 = vpop.f32.mrf.mxu0
    %v1010 = vadd.f32 %v935, %v1009
    %1011 = vmatmul.f32.gmra.mxu0 %v967
    %v1012 = vpop.f32.mrf.mxu0
    %v1013 = vadd.f32 %v938, %v1012
    %1014 = vdwg.mxu0
    %1015 = vmatpush.msra.mxu0 0.0
    %1016 = vmatpush.msra.mxu0 0.0
    %1017 = vmatpush.msra.mxu0 0.0
    %1018 = vmatpush.msra.mxu0 %v259
    %1019 = vmatpush.msra.mxu0 %v115
    %1020 = vmatpush.msra.mxu0 %v112
    %1021 = vmatpush.msra.mxu0 %v109
    %1022 = vmatpush.msra.mxu0 %v106
    %1023 = vmatpush.msra.mxu0 %v103
    %1024 = vmatpush.msra.mxu0 %v100
    %1025 = vmatpush.msra.mxu0 %v97
    %1026 = vmatpush.msra.mxu0 %v94
    %1027 = vmatpush.msra.mxu0 %v91
    %1028 = vmatpush.msra.mxu0 %v88
    %1029 = vmatpush.msra.mxu0 %v85
    %1030 = vmatpush.msra.mxu0 %v82
    %1031 = vmatmul.f32.gmra.mxu0 %v964
    %v1032 = vpop.f32.mrf.mxu0
    %v1033 = vadd.f32 %v958, %v1032
    %1034 = vmatmul.f32.gmra.mxu0 %v967
    %v1035 = vpop.f32.mrf.mxu0
    %v1036 = vadd.f32 %v961, %v1035
    %1037 = vdwg.mxu0
    %v1038 = vld [vmem:[%s883 + $0x2] sm:$0xff]
    %v1039 = vld [vmem:[%s883 + $0xa] sm:$0x1]
    %v1041 = vsel %vm60, %v1038, 0
    %v1044 = vsel %vm60, %v1039, 0
    %1046 = vmatpush.msra.mxu0 0.0
    %1047 = vmatpush.msra.mxu0 0.0
    %1048 = vmatpush.msra.mxu0 0.0
    %1049 = vmatpush.msra.mxu0 %v379
    %1050 = vmatpush.msra.mxu0 %v366
    %1051 = vmatpush.msra.mxu0 %v363
    %1052 = vmatpush.msra.mxu0 %v360
    %1053 = vmatpush.msra.mxu0 %v357
    %1054 = vmatpush.msra.mxu0 %v354
    %1055 = vmatpush.msra.mxu0 %v351
    %1056 = vmatpush.msra.mxu0 %v348
    %1057 = vmatpush.msra.mxu0 %v345
    %1058 = vmatpush.msra.mxu0 %v342
    %1059 = vmatpush.msra.mxu0 %v339
    %1060 = vmatpush.msra.mxu0 %v336
    %1061 = vmatpush.msra.mxu0 %v333
    %1062 = vmatmul.f32.gmra.mxu0 %v1041
    %v1063 = vpop.f32.mrf.mxu0
    %v1064 = vadd.f32 0.0, %v1063
    %1065 = vmatmul.f32.gmra.mxu0 %v1044
    %v1066 = vpop.f32.mrf.mxu0
    %v1067 = vadd.f32 0.0, %v1066
    %1068 = vdwg.mxu0
    %1069 = vmatpush.msra.mxu0 0.0
    %1070 = vmatpush.msra.mxu0 0.0
    %1071 = vmatpush.msra.mxu0 0.0
    %1072 = vmatpush.msra.mxu0 %v382
    %1073 = vmatpush.msra.mxu0 %v367
    %1074 = vmatpush.msra.mxu0 %v364
    %1075 = vmatpush.msra.mxu0 %v361
    %1076 = vmatpush.msra.mxu0 %v358
    %1077 = vmatpush.msra.mxu0 %v355
    %1078 = vmatpush.msra.mxu0 %v352
    %1079 = vmatpush.msra.mxu0 %v349
    %1080 = vmatpush.msra.mxu0 %v346
    %1081 = vmatpush.msra.mxu0 %v343
    %1082 = vmatpush.msra.mxu0 %v340
    %1083 = vmatpush.msra.mxu0 %v337
    %1084 = vmatpush.msra.mxu0 %v334
    %1085 = vmatmul.f32.gmra.mxu0 %v1041
    %v1086 = vpop.f32.mrf.mxu0
    %v1087 = vadd.f32 0.0, %v1086
    %1088 = vmatmul.f32.gmra.mxu0 %v1044
    %v1089 = vpop.f32.mrf.mxu0
    %v1090 = vadd.f32 0.0, %v1089
    %1091 = vdwg.mxu0
    %1092 = vmatpush.msra.mxu0 0.0
    %1093 = vmatpush.msra.mxu0 0.0
    %1094 = vmatpush.msra.mxu0 0.0
    %1095 = vmatpush.msra.mxu0 %v385
    %1096 = vmatpush.msra.mxu0 %v368
    %1097 = vmatpush.msra.mxu0 %v365
    %1098 = vmatpush.msra.mxu0 %v362
    %1099 = vmatpush.msra.mxu0 %v359
    %1100 = vmatpush.msra.mxu0 %v356
    %1101 = vmatpush.msra.mxu0 %v353
    %1102 = vmatpush.msra.mxu0 %v350
    %1103 = vmatpush.msra.mxu0 %v347
    %1104 = vmatpush.msra.mxu0 %v344
    %1105 = vmatpush.msra.mxu0 %v341
    %1106 = vmatpush.msra.mxu0 %v338
    %1107 = vmatpush.msra.mxu0 %v335
    %1108 = vmatmul.f32.gmra.mxu0 %v1041
    %v1109 = vpop.f32.mrf.mxu0
    %v1110 = vadd.f32 0.0, %v1109
    %1111 = vmatmul.f32.gmra.mxu0 %v1044
    %v1112 = vpop.f32.mrf.mxu0
    %v1113 = vadd.f32 0.0, %v1112
    %1114 = vdwg.mxu0
    %v1115 = vadd.f32 %v987, %v1064
    %v1116 = vadd.f32 %v1010, %v1087
    %v1117 = vadd.f32 %v1033, %v1110
    %v1118 = vadd.f32 %v990, %v1067
    %v1119 = vadd.f32 %v1013, %v1090
    %v1120 = vadd.f32 %v1036, %v1113
    %v1121 = vld [vmem:[%s883 + $0x3] sm:$0xff]
    %v1122 = vld [vmem:[%s883 + $0xb] sm:$0x1]
    %v1124 = vsel %vm60, %v1121, 0
    %v1127 = vsel %vm60, %v1122, 0
    %1129 = vmatpush.msra.mxu0 0.0
    %1130 = vmatpush.msra.mxu0 0.0
    %1131 = vmatpush.msra.mxu0 0.0
    %1132 = vmatpush.msra.mxu0 %v511
    %1133 = vmatpush.msra.mxu0 %v498
    %1134 = vmatpush.msra.mxu0 %v495
    %1135 = vmatpush.msra.mxu0 %v492
    %1136 = vmatpush.msra.mxu0 %v489
    %1137 = vmatpush.msra.mxu0 %v486
    %1138 = vmatpush.msra.mxu0 %v483
    %1139 = vmatpush.msra.mxu0 %v480
    %1140 = vmatpush.msra.mxu0 %v477
    %1141 = vmatpush.msra.mxu0 %v474
    %1142 = vmatpush.msra.mxu0 %v471
    %1143 = vmatpush.msra.mxu0 %v468
    %1144 = vmatpush.msra.mxu0 %v465
    %1145 = vmatmul.f32.gmra.mxu0 %v1124
    %v1146 = vpop.f32.mrf.mxu0
    %v1147 = vadd.f32 0.0, %v1146
    %1148 = vmatmul.f32.gmra.mxu0 %v1127
    %v1149 = vpop.f32.mrf.mxu0
    %v1150 = vadd.f32 0.0, %v1149
    %1151 = vdwg.mxu0
    %1152 = vmatpush.msra.mxu0 0.0
    %1153 = vmatpush.msra.mxu0 0.0
    %1154 = vmatpush.msra.mxu0 0.0
    %1155 = vmatpush.msra.mxu0 %v514
    %1156 = vmatpush.msra.mxu0 %v499
    %1157 = vmatpush.msra.mxu0 %v496
    %1158 = vmatpush.msra.mxu0 %v493
    %1159 = vmatpush.msra.mxu0 %v490
    %1160 = vmatpush.msra.mxu0 %v487
    %1161 = vmatpush.msra.mxu0 %v484
    %1162 = vmatpush.msra.mxu0 %v481
    %1163 = vmatpush.msra.mxu0 %v478
    %1164 = vmatpush.msra.mxu0 %v475
    %1165 = vmatpush.msra.mxu0 %v472
    %1166 = vmatpush.msra.mxu0 %v469
    %1167 = vmatpush.msra.mxu0 %v466
    %1168 = vmatmul.f32.gmra.mxu0 %v1124
    %v1169 = vpop.f32.mrf.mxu0
    %v1170 = vadd.f32 0.0, %v1169
    %1171 = vmatmul.f32.gmra.mxu0 %v1127
    %v1172 = vpop.f32.mrf.mxu0
    %v1173 = vadd.f32 0.0, %v1172
    %1174 = vdwg.mxu0
    %1175 = vmatpush.msra.mxu0 0.0
    %1176 = vmatpush.msra.mxu0 0.0
    %1177 = vmatpush.msra.mxu0 0.0
    %1178 = vmatpush.msra.mxu0 %v517
    %1179 = vmatpush.msra.mxu0 %v500
    %1180 = vmatpush.msra.mxu0 %v497
    %1181 = vmatpush.msra.mxu0 %v494
    %1182 = vmatpush.msra.mxu0 %v491
    %1183 = vmatpush.msra.mxu0 %v488
    %1184 = vmatpush.msra.mxu0 %v485
    %1185 = vmatpush.msra.mxu0 %v482
    %1186 = vmatpush.msra.mxu0 %v479
    %1187 = vmatpush.msra.mxu0 %v476
    %1188 = vmatpush.msra.mxu0 %v473
    %1189 = vmatpush.msra.mxu0 %v470
    %1190 = vmatpush.msra.mxu0 %v467
    %1191 = vmatmul.f32.gmra.mxu0 %v1124
    %v1192 = vpop.f32.mrf.mxu0
    %v1193 = vadd.f32 0.0, %v1192
    %1194 = vmatmul.f32.gmra.mxu0 %v1127
    %v1195 = vpop.f32.mrf.mxu0
    %v1196 = vadd.f32 0.0, %v1195
    %1197 = vdwg.mxu0
    %v1198 = vadd.f32 %v1115, %v1147
    %v1199 = vadd.f32 %v1116, %v1170
    %v1200 = vadd.f32 %v1117, %v1193
    %v1201 = vadd.f32 %v1118, %v1150
    %v1202 = vadd.f32 %v1119, %v1173
    %v1203 = vadd.f32 %v1120, %v1196
    %v1204 = vld [vmem:[%s883 + $0x4] sm:$0xff]
    %v1205 = vld [vmem:[%s883 + $0xc] sm:$0x1]
    %v1207 = vsel %vm60, %v1204, 0
    %v1210 = vsel %vm60, %v1205, 0
    %1212 = vmatpush.msra.mxu0 0.0
    %1213 = vmatpush.msra.mxu0 0.0
    %1214 = vmatpush.msra.mxu0 0.0
    %1215 = vmatpush.msra.mxu0 %v643
    %1216 = vmatpush.msra.mxu0 %v630
    %1217 = vmatpush.msra.mxu0 %v627
    %1218 = vmatpush.msra.mxu0 %v624
    %1219 = vmatpush.msra.mxu0 %v621
    %1220 = vmatpush.msra.mxu0 %v618
    %1221 = vmatpush.msra.mxu0 %v615
    %1222 = vmatpush.msra.mxu0 %v612
    %1223 = vmatpush.msra.mxu0 %v609
    %1224 = vmatpush.msra.mxu0 %v606
    %1225 = vmatpush.msra.mxu0 %v603
    %1226 = vmatpush.msra.mxu0 %v600
    %1227 = vmatpush.msra.mxu0 %v597
    %1228 = vmatmul.f32.gmra.mxu0 %v1207
    %v1229 = vpop.f32.mrf.mxu0
    %v1230 = vadd.f32 0.0, %v1229
    %1231 = vmatmul.f32.gmra.mxu0 %v1210
    %v1232 = vpop.f32.mrf.mxu0
    %v1233 = vadd.f32 0.0, %v1232
    %1234 = vdwg.mxu0
    %1235 = vmatpush.msra.mxu0 0.0
    %1236 = vmatpush.msra.mxu0 0.0
    %1237 = vmatpush.msra.mxu0 0.0
    %1238 = vmatpush.msra.mxu0 %v646
    %1239 = vmatpush.msra.mxu0 %v631
    %1240 = vmatpush.msra.mxu0 %v628
    %1241 = vmatpush.msra.mxu0 %v625
    %1242 = vmatpush.msra.mxu0 %v622
    %1243 = vmatpush.msra.mxu0 %v619
    %1244 = vmatpush.msra.mxu0 %v616
    %1245 = vmatpush.msra.mxu0 %v613
    %1246 = vmatpush.msra.mxu0 %v610
    %1247 = vmatpush.msra.mxu0 %v607
    %1248 = vmatpush.msra.mxu0 %v604
    %1249 = vmatpush.msra.mxu0 %v601
    %1250 = vmatpush.msra.mxu0 %v598
    %1251 = vmatmul.f32.gmra.mxu0 %v1207
    %v1252 = vpop.f32.mrf.mxu0
    %v1253 = vadd.f32 0.0, %v1252
    %1254 = vmatmul.f32.gmra.mxu0 %v1210
    %v1255 = vpop.f32.mrf.mxu0
    %v1256 = vadd.f32 0.0, %v1255
    %1257 = vdwg.mxu0
    %1258 = vmatpush.msra.mxu0 0.0
    %1259 = vmatpush.msra.mxu0 0.0
    %1260 = vmatpush.msra.mxu0 0.0
    %1261 = vmatpush.msra.mxu0 %v649
    %1262 = vmatpush.msra.mxu0 %v632
    %1263 = vmatpush.msra.mxu0 %v629
    %1264 = vmatpush.msra.mxu0 %v626
    %1265 = vmatpush.msra.mxu0 %v623
    %1266 = vmatpush.msra.mxu0 %v620
    %1267 = vmatpush.msra.mxu0 %v617
    %1268 = vmatpush.msra.mxu0 %v614
    %1269 = vmatpush.msra.mxu0 %v611
    %1270 = vmatpush.msra.mxu0 %v608
    %1271 = vmatpush.msra.mxu0 %v605
    %1272 = vmatpush.msra.mxu0 %v602
    %1273 = vmatpush.msra.mxu0 %v599
    %1274 = vmatmul.f32.gmra.mxu0 %v1207
    %v1275 = vpop.f32.mrf.mxu0
    %v1276 = vadd.f32 0.0, %v1275
    %1277 = vmatmul.f32.gmra.mxu0 %v1210
    %v1278 = vpop.f32.mrf.mxu0
    %v1279 = vadd.f32 0.0, %v1278
    %1280 = vdwg.mxu0
    %v1281 = vadd.f32 %v1198, %v1230
    %v1282 = vadd.f32 %v1199, %v1253
    %v1283 = vadd.f32 %v1200, %v1276
    %v1284 = vadd.f32 %v1201, %v1233
    %v1285 = vadd.f32 %v1202, %v1256
    %v1286 = vadd.f32 %v1203, %v1279
    %v1287 = vld [vmem:[%s883 + $0x5] sm:$0xff]
    %v1288 = vld [vmem:[%s883 + $0xd] sm:$0x1]
    %v1290 = vsel %vm60, %v1287, 0
    %v1293 = vsel %vm60, %v1288, 0
    %1295 = vmatpush.msra.mxu0 0.0
    %1296 = vmatpush.msra.mxu0 0.0
    %1297 = vmatpush.msra.mxu0 0.0
    %1298 = vmatpush.msra.mxu0 %v775
    %1299 = vmatpush.msra.mxu0 %v762
    %1300 = vmatpush.msra.mxu0 %v759
    %1301 = vmatpush.msra.mxu0 %v756
    %1302 = vmatpush.msra.mxu0 %v753
    %1303 = vmatpush.msra.mxu0 %v750
    %1304 = vmatpush.msra.mxu0 %v747
    %1305 = vmatpush.msra.mxu0 %v744
    %1306 = vmatpush.msra.mxu0 %v741
    %1307 = vmatpush.msra.mxu0 %v738
    %1308 = vmatpush.msra.mxu0 %v735
    %1309 = vmatpush.msra.mxu0 %v732
    %1310 = vmatpush.msra.mxu0 %v729
    %1311 = vmatmul.f32.gmra.mxu0 %v1290
    %v1312 = vpop.f32.mrf.mxu0
    %v1313 = vadd.f32 0.0, %v1312
    %1314 = vmatmul.f32.gmra.mxu0 %v1293
    %v1315 = vpop.f32.mrf.mxu0
    %v1316 = vadd.f32 0.0, %v1315
    %1317 = vdwg.mxu0
    %1318 = vmatpush.msra.mxu0 0.0
    %1319 = vmatpush.msra.mxu0 0.0
    %1320 = vmatpush.msra.mxu0 0.0
    %1321 = vmatpush.msra.mxu0 %v778
    %1322 = vmatpush.msra.mxu0 %v763
    %1323 = vmatpush.msra.mxu0 %v760
    %1324 = vmatpush.msra.mxu0 %v757
    %1325 = vmatpush.msra.mxu0 %v754
    %1326 = vmatpush.msra.mxu0 %v751
    %1327 = vmatpush.msra.mxu0 %v748
    %1328 = vmatpush.msra.mxu0 %v745
    %1329 = vmatpush.msra.mxu0 %v742
    %1330 = vmatpush.msra.mxu0 %v739
    %1331 = vmatpush.msra.mxu0 %v736
    %1332 = vmatpush.msra.mxu0 %v733
    %1333 = vmatpush.msra.mxu0 %v730
    %1334 = vmatmul.f32.gmra.mxu0 %v1290
    %v1335 = vpop.f32.mrf.mxu0
    %v1336 = vadd.f32 0.0, %v1335
    %1337 = vmatmul.f32.gmra.mxu0 %v1293
    %v1338 = vpop.f32.mrf.mxu0
    %v1339 = vadd.f32 0.0, %v1338
    %1340 = vdwg.mxu0
    %1341 = vmatpush.msra.mxu0 0.0
    %1342 = vmatpush.msra.mxu0 0.0
    %1343 = vmatpush.msra.mxu0 0.0
    %1344 = vmatpush.msra.mxu0 %v781
    %1345 = vmatpush.msra.mxu0 %v764
    %1346 = vmatpush.msra.mxu0 %v761
    %1347 = vmatpush.msra.mxu0 %v758
    %1348 = vmatpush.msra.mxu0 %v755
    %1349 = vmatpush.msra.mxu0 %v752
    %1350 = vmatpush.msra.mxu0 %v749
    %1351 = vmatpush.msra.mxu0 %v746
    %1352 = vmatpush.msra.mxu0 %v743
    %1353 = vmatpush.msra.mxu0 %v740
    %1354 = vmatpush.msra.mxu0 %v737
    %1355 = vmatpush.msra.mxu0 %v734
    %1356 = vmatpush.msra.mxu0 %v731
    %1357 = vmatmul.f32.gmra.mxu0 %v1290
    %v1358 = vpop.f32.mrf.mxu0
    %v1359 = vadd.f32 0.0, %v1358
    %1360 = vmatmul.f32.gmra.mxu0 %v1293
    %v1361 = vpop.f32.mrf.mxu0
    %v1362 = vadd.f32 0.0, %v1361
    %1363 = vdwg.mxu0
    %v1364 = vadd.f32 %v1281, %v1313
    %v1365 = vadd.f32 %v1282, %v1336
    %v1366 = vadd.f32 %v1283, %v1359
    %v1367 = vadd.f32 %v1284, %v1316
    %v1368 = vadd.f32 %v1285, %v1339
    %v1369 = vadd.f32 %v1286, %v1362
    %v1370 = vsel %vm858, %v1367, -inf
    %v1371 = vmax.f32 %v1364, %v1370
    %v1372 = vrot.slane %v1371, 4
    %v1373 = vmax.f32 %v1371, %v1372
    %v1374 = vrot.slane %v1373, 2
    %v1375 = vmax.f32 %v1373, %v1374
    %v1376 = vrot.slane %v1375, 1
    %v1377 = vmax.f32 %v1375, %v1376
    %v1378 = vsel %vm858, %v1368, -inf
    %v1379 = vmax.f32 %v1365, %v1378
    %v1380 = vrot.slane %v1379, 4
    %v1381 = vmax.f32 %v1379, %v1380
    %v1382 = vrot.slane %v1381, 2
    %v1383 = vmax.f32 %v1381, %v1382
    %v1384 = vrot.slane %v1383, 1
    %v1385 = vmax.f32 %v1383, %v1384
    %v1386 = vsel %vm858, %v1369, -inf
    %v1387 = vmax.f32 %v1366, %v1386
    %v1388 = vrot.slane %v1387, 4
    %v1389 = vmax.f32 %v1387, %v1388
    %v1390 = vrot.slane %v1389, 2
    %v1391 = vmax.f32 %v1389, %v1390
    %v1392 = vrot.slane %v1391, 1
    %v1393 = vmax.f32 %v1391, %v1392
    %s1394 = scalar_lea.vmem [#allocation2], 32
    %v1395 = vld [vmem:[%s1394] sm:$0xff]
    %v1396 = vld [vmem:[%s1394 + $0x8] sm:$0x1]
    %v1397 = vld [vmem:[%s1394 + $0x1] sm:$0xff]
    %v1398 = vld [vmem:[%s1394 + $0x9] sm:$0x1]
    %v1400 = vsel %vm60, %v1397, 0
    %v1403 = vsel %vm60, %v1398, 0
    %1405 = vmatpush.msra.mxu0 0.0
    %1406 = vmatpush.msra.mxu0 0.0
    %1407 = vmatpush.msra.mxu0 0.0
    %1408 = vmatpush.msra.mxu0 %v169
    %1409 = vmatpush.msra.mxu0 %v155
    %1410 = vmatpush.msra.mxu0 %v152
    %1411 = vmatpush.msra.mxu0 %v149
    %1412 = vmatpush.msra.mxu0 %v146
    %1413 = vmatpush.msra.mxu0 %v143
    %1414 = vmatpush.msra.mxu0 %v140
    %1415 = vmatpush.msra.mxu0 %v137
    %1416 = vmatpush.msra.mxu0 %v134
    %1417 = vmatpush.msra.mxu0 %v131
    %1418 = vmatpush.msra.mxu0 %v128
    %1419 = vmatpush.msra.mxu0 %v125
    %1420 = vmatpush.msra.mxu0 %v122
    %1421 = vmatmul.f32.gmra.mxu0 %v1400
    %v1422 = vpop.f32.mrf.mxu0
    %v1423 = vadd.f32 0.0, %v1422
    %1424 = vmatmul.f32.gmra.mxu0 %v1403
    %v1425 = vpop.f32.mrf.mxu0
    %v1426 = vadd.f32 0.0, %v1425
    %1427 = vdwg.mxu0
    %1428 = vmatpush.msra.mxu0 0.0
    %1429 = vmatpush.msra.mxu0 0.0
    %1430 = vmatpush.msra.mxu0 0.0
    %1431 = vmatpush.msra.mxu0 %v172
    %1432 = vmatpush.msra.mxu0 %v156
    %1433 = vmatpush.msra.mxu0 %v153
    %1434 = vmatpush.msra.mxu0 %v150
    %1435 = vmatpush.msra.mxu0 %v147
    %1436 = vmatpush.msra.mxu0 %v144
    %1437 = vmatpush.msra.mxu0 %v141
    %1438 = vmatpush.msra.mxu0 %v138
    %1439 = vmatpush.msra.mxu0 %v135
    %1440 = vmatpush.msra.mxu0 %v132
    %1441 = vmatpush.msra.mxu0 %v129
    %1442 = vmatpush.msra.mxu0 %v126
    %1443 = vmatpush.msra.mxu0 %v123
    %1444 = vmatmul.f32.gmra.mxu0 %v1400
    %v1445 = vpop.f32.mrf.mxu0
    %v1446 = vadd.f32 0.0, %v1445
    %1447 = vmatmul.f32.gmra.mxu0 %v1403
    %v1448 = vpop.f32.mrf.mxu0
    %v1449 = vadd.f32 0.0, %v1448
    %1450 = vdwg.mxu0
    %1451 = vmatpush.msra.mxu0 0.0
    %1452 = vmatpush.msra.mxu0 0.0
    %1453 = vmatpush.msra.mxu0 0.0
    %1454 = vmatpush.msra.mxu0 %v175
    %1455 = vmatpush.msra.mxu0 %v157
    %1456 = vmatpush.msra.mxu0 %v154
    %1457 = vmatpush.msra.mxu0 %v151
    %1458 = vmatpush.msra.mxu0 %v148
    %1459 = vmatpush.msra.mxu0 %v145
    %1460 = vmatpush.msra.mxu0 %v142
    %1461 = vmatpush.msra.mxu0 %v139
    %1462 = vmatpush.msra.mxu0 %v136
    %1463 = vmatpush.msra.mxu0 %v133
    %1464 = vmatpush.msra.mxu0 %v130
    %1465 = vmatpush.msra.mxu0 %v127
    %1466 = vmatpush.msra.mxu0 %v124
    %1467 = vmatmul.f32.gmra.mxu0 %v1400
    %v1468 = vpop.f32.mrf.mxu0
    %v1469 = vadd.f32 0.0, %v1468
    %1470 = vmatmul.f32.gmra.mxu0 %v1403
    %v1471 = vpop.f32.mrf.mxu0
    %v1472 = vadd.f32 0.0, %v1471
    %1473 = vdwg.mxu0
    %v1475 = vsel %vm60, %v1395, 0
    %v1478 = vsel %vm60, %v1396, 0
    %1480 = vmatpush.msra.mxu0 0.0
    %1481 = vmatpush.msra.mxu0 0.0
    %1482 = vmatpush.msra.mxu0 0.0
    %1483 = vmatpush.msra.mxu0 %v253
    %1484 = vmatpush.msra.mxu0 %v113
    %1485 = vmatpush.msra.mxu0 %v110
    %1486 = vmatpush.msra.mxu0 %v107
    %1487 = vmatpush.msra.mxu0 %v104
    %1488 = vmatpush.msra.mxu0 %v101
    %1489 = vmatpush.msra.mxu0 %v98
    %1490 = vmatpush.msra.mxu0 %v95
    %1491 = vmatpush.msra.mxu0 %v92
    %1492 = vmatpush.msra.mxu0 %v89
    %1493 = vmatpush.msra.mxu0 %v86
    %1494 = vmatpush.msra.mxu0 %v83
    %1495 = vmatpush.msra.mxu0 %v80
    %1496 = vmatmul.f32.gmra.mxu0 %v1475
    %v1497 = vpop.f32.mrf.mxu0
    %v1498 = vadd.f32 %v1423, %v1497
    %1499 = vmatmul.f32.gmra.mxu0 %v1478
    %v1500 = vpop.f32.mrf.mxu0
    %v1501 = vadd.f32 %v1426, %v1500
    %1502 = vdwg.mxu0
    %1503 = vmatpush.msra.mxu0 0.0
    %1504 = vmatpush.msra.mxu0 0.0
    %1505 = vmatpush.msra.mxu0 0.0
    %1506 = vmatpush.msra.mxu0 %v256
    %1507 = vmatpush.msra.mxu0 %v114
    %1508 = vmatpush.msra.mxu0 %v111
    %1509 = vmatpush.msra.mxu0 %v108
    %1510 = vmatpush.msra.mxu0 %v105
    %1511 = vmatpush.msra.mxu0 %v102
    %1512 = vmatpush.msra.mxu0 %v99
    %1513 = vmatpush.msra.mxu0 %v96
    %1514 = vmatpush.msra.mxu0 %v93
    %1515 = vmatpush.msra.mxu0 %v90
    %1516 = vmatpush.msra.mxu0 %v87
    %1517 = vmatpush.msra.mxu0 %v84
    %1518 = vmatpush.msra.mxu0 %v81
    %1519 = vmatmul.f32.gmra.mxu0 %v1475
    %v1520 = vpop.f32.mrf.mxu0
    %v1521 = vadd.f32 %v1446, %v1520
    %1522 = vmatmul.f32.gmra.mxu0 %v1478
    %v1523 = vpop.f32.mrf.mxu0
    %v1524 = vadd.f32 %v1449, %v1523
    %1525 = vdwg.mxu0
    %1526 = vmatpush.msra.mxu0 0.0
    %1527 = vmatpush.msra.mxu0 0.0
    %1528 = vmatpush.msra.mxu0 0.0
    %1529 = vmatpush.msra.mxu0 %v259
    %1530 = vmatpush.msra.mxu0 %v115
    %1531 = vmatpush.msra.mxu0 %v112
    %1532 = vmatpush.msra.mxu0 %v109
    %1533 = vmatpush.msra.mxu0 %v106
    %1534 = vmatpush.msra.mxu0 %v103
    %1535 = vmatpush.msra.mxu0 %v100
    %1536 = vmatpush.msra.mxu0 %v97
    %1537 = vmatpush.msra.mxu0 %v94
    %1538 = vmatpush.msra.mxu0 %v91
    %1539 = vmatpush.msra.mxu0 %v88
    %1540 = vmatpush.msra.mxu0 %v85
    %1541 = vmatpush.msra.mxu0 %v82
    %1542 = vmatmul.f32.gmra.mxu0 %v1475
    %v1543 = vpop.f32.mrf.mxu0
    %v1544 = vadd.f32 %v1469, %v1543
    %1545 = vmatmul.f32.gmra.mxu0 %v1478
    %v1546 = vpop.f32.mrf.mxu0
    %v1547 = vadd.f32 %v1472, %v1546
    %1548 = vdwg.mxu0
    %v1549 = vld [vmem:[%s1394 + $0x2] sm:$0xff]
    %v1550 = vld [vmem:[%s1394 + $0xa] sm:$0x1]
    %v1552 = vsel %vm60, %v1549, 0
    %v1555 = vsel %vm60, %v1550, 0
    %1557 = vmatpush.msra.mxu0 0.0
    %1558 = vmatpush.msra.mxu0 0.0
    %1559 = vmatpush.msra.mxu0 0.0
    %1560 = vmatpush.msra.mxu0 %v379
    %1561 = vmatpush.msra.mxu0 %v366
    %1562 = vmatpush.msra.mxu0 %v363
    %1563 = vmatpush.msra.mxu0 %v360
    %1564 = vmatpush.msra.mxu0 %v357
    %1565 = vmatpush.msra.mxu0 %v354
    %1566 = vmatpush.msra.mxu0 %v351
    %1567 = vmatpush.msra.mxu0 %v348
    %1568 = vmatpush.msra.mxu0 %v345
    %1569 = vmatpush.msra.mxu0 %v342
    %1570 = vmatpush.msra.mxu0 %v339
    %1571 = vmatpush.msra.mxu0 %v336
    %1572 = vmatpush.msra.mxu0 %v333
    %1573 = vmatmul.f32.gmra.mxu0 %v1552
    %v1574 = vpop.f32.mrf.mxu0
    %v1575 = vadd.f32 0.0, %v1574
    %1576 = vmatmul.f32.gmra.mxu0 %v1555
    %v1577 = vpop.f32.mrf.mxu0
    %v1578 = vadd.f32 0.0, %v1577
    %1579 = vdwg.mxu0
    %1580 = vmatpush.msra.mxu0 0.0
    %1581 = vmatpush.msra.mxu0 0.0
    %1582 = vmatpush.msra.mxu0 0.0
    %1583 = vmatpush.msra.mxu0 %v382
    %1584 = vmatpush.msra.mxu0 %v367
    %1585 = vmatpush.msra.mxu0 %v364
    %1586 = vmatpush.msra.mxu0 %v361
    %1587 = vmatpush.msra.mxu0 %v358
    %1588 = vmatpush.msra.mxu0 %v355
    %1589 = vmatpush.msra.mxu0 %v352
    %1590 = vmatpush.msra.mxu0 %v349
    %1591 = vmatpush.msra.mxu0 %v346
    %1592 = vmatpush.msra.mxu0 %v343
    %1593 = vmatpush.msra.mxu0 %v340
    %1594 = vmatpush.msra.mxu0 %v337
    %1595 = vmatpush.msra.mxu0 %v334
    %1596 = vmatmul.f32.gmra.mxu0 %v1552
    %v1597 = vpop.f32.mrf.mxu0
    %v1598 = vadd.f32 0.0, %v1597
    %1599 = vmatmul.f32.gmra.mxu0 %v1555
    %v1600 = vpop.f32.mrf.mxu0
    %v1601 = vadd.f32 0.0, %v1600
    %1602 = vdwg.mxu0
    %1603 = vmatpush.msra.mxu0 0.0
    %1604 = vmatpush.msra.mxu0 0.0
    %1605 = vmatpush.msra.mxu0 0.0
    %1606 = vmatpush.msra.mxu0 %v385
    %1607 = vmatpush.msra.mxu0 %v368
    %1608 = vmatpush.msra.mxu0 %v365
    %1609 = vmatpush.msra.mxu0 %v362
    %1610 = vmatpush.msra.mxu0 %v359
    %1611 = vmatpush.msra.mxu0 %v356
    %1612 = vmatpush.msra.mxu0 %v353
    %1613 = vmatpush.msra.mxu0 %v350
    %1614 = vmatpush.msra.mxu0 %v347
    %1615 = vmatpush.msra.mxu0 %v344
    %1616 = vmatpush.msra.mxu0 %v341
    %1617 = vmatpush.msra.mxu0 %v338
    %1618 = vmatpush.msra.mxu0 %v335
    %1619 = vmatmul.f32.gmra.mxu0 %v1552
    %v1620 = vpop.f32.mrf.mxu0
    %v1621 = vadd.f32 0.0, %v1620
    %1622 = vmatmul.f32.gmra.mxu0 %v1555
    %v1623 = vpop.f32.mrf.mxu0
    %v1624 = vadd.f32 0.0, %v1623
    %1625 = vdwg.mxu0
    %v1626 = vadd.f32 %v1498, %v1575
    %v1627 = vadd.f32 %v1521, %v1598
    %v1628 = vadd.f32 %v1544, %v1621
    %v1629 = vadd.f32 %v1501, %v1578
    %v1630 = vadd.f32 %v1524, %v1601
    %v1631 = vadd.f32 %v1547, %v1624
    %v1632 = vld [vmem:[%s1394 + $0x3] sm:$0xff]
    %v1633 = vld [vmem:[%s1394 + $0xb] sm:$0x1]
    %v1635 = vsel %vm60, %v1632, 0
    %v1638 = vsel %vm60, %v1633, 0
    %1640 = vmatpush.msra.mxu0 0.0
    %1641 = vmatpush.msra.mxu0 0.0
    %1642 = vmatpush.msra.mxu0 0.0
    %1643 = vmatpush.msra.mxu0 %v511
    %1644 = vmatpush.msra.mxu0 %v498
    %1645 = vmatpush.msra.mxu0 %v495
    %1646 = vmatpush.msra.mxu0 %v492
    %1647 = vmatpush.msra.mxu0 %v489
    %1648 = vmatpush.msra.mxu0 %v486
    %1649 = vmatpush.msra.mxu0 %v483
    %1650 = vmatpush.msra.mxu0 %v480
    %1651 = vmatpush.msra.mxu0 %v477
    %1652 = vmatpush.msra.mxu0 %v474
    %1653 = vmatpush.msra.mxu0 %v471
    %1654 = vmatpush.msra.mxu0 %v468
    %1655 = vmatpush.msra.mxu0 %v465
    %1656 = vmatmul.f32.gmra.mxu0 %v1635
    %v1657 = vpop.f32.mrf.mxu0
    %v1658 = vadd.f32 0.0, %v1657
    %1659 = vmatmul.f32.gmra.mxu0 %v1638
    %v1660 = vpop.f32.mrf.mxu0
    %v1661 = vadd.f32 0.0, %v1660
    %1662 = vdwg.mxu0
    %1663 = vmatpush.msra.mxu0 0.0
    %1664 = vmatpush.msra.mxu0 0.0
    %1665 = vmatpush.msra.mxu0 0.0
    %1666 = vmatpush.msra.mxu0 %v514
    %1667 = vmatpush.msra.mxu0 %v499
    %1668 = vmatpush.msra.mxu0 %v496
    %1669 = vmatpush.msra.mxu0 %v493
    %1670 = vmatpush.msra.mxu0 %v490
    %1671 = vmatpush.msra.mxu0 %v487
    %1672 = vmatpush.msra.mxu0 %v484
    %1673 = vmatpush.msra.mxu0 %v481
    %1674 = vmatpush.msra.mxu0 %v478
    %1675 = vmatpush.msra.mxu0 %v475
    %1676 = vmatpush.msra.mxu0 %v472
    %1677 = vmatpush.msra.mxu0 %v469
    %1678 = vmatpush.msra.mxu0 %v466
    %1679 = vmatmul.f32.gmra.mxu0 %v1635
    %v1680 = vpop.f32.mrf.mxu0
    %v1681 = vadd.f32 0.0, %v1680
    %1682 = vmatmul.f32.gmra.mxu0 %v1638
    %v1683 = vpop.f32.mrf.mxu0
    %v1684 = vadd.f32 0.0, %v1683
    %1685 = vdwg.mxu0
    %1686 = vmatpush.msra.mxu0 0.0
    %1687 = vmatpush.msra.mxu0 0.0
    %1688 = vmatpush.msra.mxu0 0.0
    %1689 = vmatpush.msra.mxu0 %v517
    %1690 = vmatpush.msra.mxu0 %v500
    %1691 = vmatpush.msra.mxu0 %v497
    %1692 = vmatpush.msra.mxu0 %v494
    %1693 = vmatpush.msra.mxu0 %v491
    %1694 = vmatpush.msra.mxu0 %v488
    %1695 = vmatpush.msra.mxu0 %v485
    %1696 = vmatpush.msra.mxu0 %v482
    %1697 = vmatpush.msra.mxu0 %v479
    %1698 = vmatpush.msra.mxu0 %v476
    %1699 = vmatpush.msra.mxu0 %v473
    %1700 = vmatpush.msra.mxu0 %v470
    %1701 = vmatpush.msra.mxu0 %v467
    %1702 = vmatmul.f32.gmra.mxu0 %v1635
    %v1703 = vpop.f32.mrf.mxu0
    %v1704 = vadd.f32 0.0, %v1703
    %1705 = vmatmul.f32.gmra.mxu0 %v1638
    %v1706 = vpop.f32.mrf.mxu0
    %v1707 = vadd.f32 0.0, %v1706
    %1708 = vdwg.mxu0
    %v1709 = vadd.f32 %v1626, %v1658
    %v1710 = vadd.f32 %v1627, %v1681
    %v1711 = vadd.f32 %v1628, %v1704
    %v1712 = vadd.f32 %v1629, %v1661
    %v1713 = vadd.f32 %v1630, %v1684
    %v1714 = vadd.f32 %v1631, %v1707
    %v1715 = vld [vmem:[%s1394 + $0x4] sm:$0xff]
    %v1716 = vld [vmem:[%s1394 + $0xc] sm:$0x1]
    %v1718 = vsel %vm60, %v1715, 0
    %v1721 = vsel %vm60, %v1716, 0
    %1723 = vmatpush.msra.mxu0 0.0
    %1724 = vmatpush.msra.mxu0 0.0
    %1725 = vmatpush.msra.mxu0 0.0
    %1726 = vmatpush.msra.mxu0 %v643
    %1727 = vmatpush.msra.mxu0 %v630
    %1728 = vmatpush.msra.mxu0 %v627
    %1729 = vmatpush.msra.mxu0 %v624
    %1730 = vmatpush.msra.mxu0 %v621
    %1731 = vmatpush.msra.mxu0 %v618
    %1732 = vmatpush.msra.mxu0 %v615
    %1733 = vmatpush.msra.mxu0 %v612
    %1734 = vmatpush.msra.mxu0 %v609
    %1735 = vmatpush.msra.mxu0 %v606
    %1736 = vmatpush.msra.mxu0 %v603
    %1737 = vmatpush.msra.mxu0 %v600
    %1738 = vmatpush.msra.mxu0 %v597
    %1739 = vmatmul.f32.gmra.mxu0 %v1718
    %v1740 = vpop.f32.mrf.mxu0
    %v1741 = vadd.f32 0.0, %v1740
    %1742 = vmatmul.f32.gmra.mxu0 %v1721
    %v1743 = vpop.f32.mrf.mxu0
    %v1744 = vadd.f32 0.0, %v1743
    %1745 = vdwg.mxu0
    %1746 = vmatpush.msra.mxu0 0.0
    %1747 = vmatpush.msra.mxu0 0.0
    %1748 = vmatpush.msra.mxu0 0.0
    %1749 = vmatpush.msra.mxu0 %v646
    %1750 = vmatpush.msra.mxu0 %v631
    %1751 = vmatpush.msra.mxu0 %v628
    %1752 = vmatpush.msra.mxu0 %v625
    %1753 = vmatpush.msra.mxu0 %v622
    %1754 = vmatpush.msra.mxu0 %v619
    %1755 = vmatpush.msra.mxu0 %v616
    %1756 = vmatpush.msra.mxu0 %v613
    %1757 = vmatpush.msra.mxu0 %v610
    %1758 = vmatpush.msra.mxu0 %v607
    %1759 = vmatpush.msra.mxu0 %v604
    %1760 = vmatpush.msra.mxu0 %v601
    %1761 = vmatpush.msra.mxu0 %v598
    %1762 = vmatmul.f32.gmra.mxu0 %v1718
    %v1763 = vpop.f32.mrf.mxu0
    %v1764 = vadd.f32 0.0, %v1763
    %1765 = vmatmul.f32.gmra.mxu0 %v1721
    %v1766 = vpop.f32.mrf.mxu0
    %v1767 = vadd.f32 0.0, %v1766
    %1768 = vdwg.mxu0
    %1769 = vmatpush.msra.mxu0 0.0
    %1770 = vmatpush.msra.mxu0 0.0
    %1771 = vmatpush.msra.mxu0 0.0
    %1772 = vmatpush.msra.mxu0 %v649
    %1773 = vmatpush.msra.mxu0 %v632
    %1774 = vmatpush.msra.mxu0 %v629
    %1775 = vmatpush.msra.mxu0 %v626
    %1776 = vmatpush.msra.mxu0 %v623
    %1777 = vmatpush.msra.mxu0 %v620
    %1778 = vmatpush.msra.mxu0 %v617
    %1779 = vmatpush.msra.mxu0 %v614
    %1780 = vmatpush.msra.mxu0 %v611
    %1781 = vmatpush.msra.mxu0 %v608
    %1782 = vmatpush.msra.mxu0 %v605
    %1783 = vmatpush.msra.mxu0 %v602
    %1784 = vmatpush.msra.mxu0 %v599
    %1785 = vmatmul.f32.gmra.mxu0 %v1718
    %v1786 = vpop.f32.mrf.mxu0
    %v1787 = vadd.f32 0.0, %v1786
    %1788 = vmatmul.f32.gmra.mxu0 %v1721
    %v1789 = vpop.f32.mrf.mxu0
    %v1790 = vadd.f32 0.0, %v1789
    %1791 = vdwg.mxu0
    %v1792 = vadd.f32 %v1709, %v1741
    %v1793 = vadd.f32 %v1710, %v1764
    %v1794 = vadd.f32 %v1711, %v1787
    %v1795 = vadd.f32 %v1712, %v1744
    %v1796 = vadd.f32 %v1713, %v1767
    %v1797 = vadd.f32 %v1714, %v1790
    %v1798 = vld [vmem:[%s1394 + $0x5] sm:$0xff]
    %v1799 = vld [vmem:[%s1394 + $0xd] sm:$0x1]
    %v1801 = vsel %vm60, %v1798, 0
    %v1804 = vsel %vm60, %v1799, 0
    %1806 = vmatpush.msra.mxu0 0.0
    %1807 = vmatpush.msra.mxu0 0.0
    %1808 = vmatpush.msra.mxu0 0.0
    %1809 = vmatpush.msra.mxu0 %v775
    %1810 = vmatpush.msra.mxu0 %v762
    %1811 = vmatpush.msra.mxu0 %v759
    %1812 = vmatpush.msra.mxu0 %v756
    %1813 = vmatpush.msra.mxu0 %v753
    %1814 = vmatpush.msra.mxu0 %v750
    %1815 = vmatpush.msra.mxu0 %v747
    %1816 = vmatpush.msra.mxu0 %v744
    %1817 = vmatpush.msra.mxu0 %v741
    %1818 = vmatpush.msra.mxu0 %v738
    %1819 = vmatpush.msra.mxu0 %v735
    %1820 = vmatpush.msra.mxu0 %v732
    %1821 = vmatpush.msra.mxu0 %v729
    %1822 = vmatmul.f32.gmra.mxu0 %v1801
    %v1823 = vpop.f32.mrf.mxu0
    %v1824 = vadd.f32 0.0, %v1823
    %1825 = vmatmul.f32.gmra.mxu0 %v1804
    %v1826 = vpop.f32.mrf.mxu0
    %v1827 = vadd.f32 0.0, %v1826
    %1828 = vdwg.mxu0
    %1829 = vmatpush.msra.mxu0 0.0
    %1830 = vmatpush.msra.mxu0 0.0
    %1831 = vmatpush.msra.mxu0 0.0
    %1832 = vmatpush.msra.mxu0 %v778
    %1833 = vmatpush.msra.mxu0 %v763
    %1834 = vmatpush.msra.mxu0 %v760
    %1835 = vmatpush.msra.mxu0 %v757
    %1836 = vmatpush.msra.mxu0 %v754
    %1837 = vmatpush.msra.mxu0 %v751
    %1838 = vmatpush.msra.mxu0 %v748
    %1839 = vmatpush.msra.mxu0 %v745
    %1840 = vmatpush.msra.mxu0 %v742
    %1841 = vmatpush.msra.mxu0 %v739
    %1842 = vmatpush.msra.mxu0 %v736
    %1843 = vmatpush.msra.mxu0 %v733
    %1844 = vmatpush.msra.mxu0 %v730
    %1845 = vmatmul.f32.gmra.mxu0 %v1801
    %v1846 = vpop.f32.mrf.mxu0
    %v1847 = vadd.f32 0.0, %v1846
    %1848 = vmatmul.f32.gmra.mxu0 %v1804
    %v1849 = vpop.f32.mrf.mxu0
    %v1850 = vadd.f32 0.0, %v1849
    %1851 = vdwg.mxu0
    %1852 = vmatpush.msra.mxu0 0.0
    %1853 = vmatpush.msra.mxu0 0.0
    %1854 = vmatpush.msra.mxu0 0.0
    %1855 = vmatpush.msra.mxu0 %v781
    %1856 = vmatpush.msra.mxu0 %v764
    %1857 = vmatpush.msra.mxu0 %v761
    %1858 = vmatpush.msra.mxu0 %v758
    %1859 = vmatpush.msra.mxu0 %v755
    %1860 = vmatpush.msra.mxu0 %v752
    %1861 = vmatpush.msra.mxu0 %v749
    %1862 = vmatpush.msra.mxu0 %v746
    %1863 = vmatpush.msra.mxu0 %v743
    %1864 = vmatpush.msra.mxu0 %v740
    %1865 = vmatpush.msra.mxu0 %v737
    %1866 = vmatpush.msra.mxu0 %v734
    %1867 = vmatpush.msra.mxu0 %v731
    %1868 = vmatmul.f32.gmra.mxu0 %v1801
    %v1869 = vpop.f32.mrf.mxu0
    %v1870 = vadd.f32 0.0, %v1869
    %1871 = vmatmul.f32.gmra.mxu0 %v1804
    %v1872 = vpop.f32.mrf.mxu0
    %v1873 = vadd.f32 0.0, %v1872
    %1874 = vdwg.mxu0
    %v1875 = vadd.f32 %v1792, %v1824
    %v1876 = vadd.f32 %v1793, %v1847
    %v1877 = vadd.f32 %v1794, %v1870
    %v1878 = vadd.f32 %v1795, %v1827
    %v1879 = vadd.f32 %v1796, %v1850
    %v1880 = vadd.f32 %v1797, %v1873
    %v1881 = vsel %vm858, %v1878, -inf
    %v1882 = vmax.f32 %v1875, %v1881
    %v1883 = vrot.slane %v1882, 4
    %v1884 = vmax.f32 %v1882, %v1883
    %v1885 = vrot.slane %v1884, 2
    %v1886 = vmax.f32 %v1884, %v1885
    %v1887 = vrot.slane %v1886, 1
    %v1888 = vmax.f32 %v1886, %v1887
    %v1889 = vsel %vm858, %v1879, -inf
    %v1890 = vmax.f32 %v1876, %v1889
    %v1891 = vrot.slane %v1890, 4
    %v1892 = vmax.f32 %v1890, %v1891
    %v1893 = vrot.slane %v1892, 2
    %v1894 = vmax.f32 %v1892, %v1893
    %v1895 = vrot.slane %v1894, 1
    %v1896 = vmax.f32 %v1894, %v1895
    %v1897 = vsel %vm858, %v1880, -inf
    %v1898 = vmax.f32 %v1877, %v1897
    %v1899 = vrot.slane %v1898, 4
    %v1900 = vmax.f32 %v1898, %v1899
    %v1901 = vrot.slane %v1900, 2
    %v1902 = vmax.f32 %v1900, %v1901
    %v1903 = vrot.slane %v1902, 1
    %v1904 = vmax.f32 %v1902, %v1903
    %s1905 = scalar_lea.vmem [#allocation2], 48
    %v1906 = vld [vmem:[%s1905] sm:$0xff]
    %v1907 = vld [vmem:[%s1905 + $0x8] sm:$0x1]
    %v1908 = vld [vmem:[%s1905 + $0x1] sm:$0xff]
    %v1909 = vld [vmem:[%s1905 + $0x9] sm:$0x1]
    %v1911 = vsel %vm60, %v1908, 0
    %v1914 = vsel %vm60, %v1909, 0
    %1916 = vmatpush.msra.mxu0 0.0
    %1917 = vmatpush.msra.mxu0 0.0
    %1918 = vmatpush.msra.mxu0 0.0
    %1919 = vmatpush.msra.mxu0 %v169
    %1920 = vmatpush.msra.mxu0 %v155
    %1921 = vmatpush.msra.mxu0 %v152
    %1922 = vmatpush.msra.mxu0 %v149
    %1923 = vmatpush.msra.mxu0 %v146
    %1924 = vmatpush.msra.mxu0 %v143
    %1925 = vmatpush.msra.mxu0 %v140
    %1926 = vmatpush.msra.mxu0 %v137
    %1927 = vmatpush.msra.mxu0 %v134
    %1928 = vmatpush.msra.mxu0 %v131
    %1929 = vmatpush.msra.mxu0 %v128
    %1930 = vmatpush.msra.mxu0 %v125
    %1931 = vmatpush.msra.mxu0 %v122
    %1932 = vmatmul.f32.gmra.mxu0 %v1911
    %v1933 = vpop.f32.mrf.mxu0
    %v1934 = vadd.f32 0.0, %v1933
    %1935 = vmatmul.f32.gmra.mxu0 %v1914
    %v1936 = vpop.f32.mrf.mxu0
    %v1937 = vadd.f32 0.0, %v1936
    %1938 = vdwg.mxu0
    %1939 = vmatpush.msra.mxu0 0.0
    %1940 = vmatpush.msra.mxu0 0.0
    %1941 = vmatpush.msra.mxu0 0.0
    %1942 = vmatpush.msra.mxu0 %v172
    %1943 = vmatpush.msra.mxu0 %v156
    %1944 = vmatpush.msra.mxu0 %v153
    %1945 = vmatpush.msra.mxu0 %v150
    %1946 = vmatpush.msra.mxu0 %v147
    %1947 = vmatpush.msra.mxu0 %v144
    %1948 = vmatpush.msra.mxu0 %v141
    %1949 = vmatpush.msra.mxu0 %v138
    %1950 = vmatpush.msra.mxu0 %v135
    %1951 = vmatpush.msra.mxu0 %v132
    %1952 = vmatpush.msra.mxu0 %v129
    %1953 = vmatpush.msra.mxu0 %v126
    %1954 = vmatpush.msra.mxu0 %v123
    %1955 = vmatmul.f32.gmra.mxu0 %v1911
    %v1956 = vpop.f32.mrf.mxu0
    %v1957 = vadd.f32 0.0, %v1956
    %1958 = vmatmul.f32.gmra.mxu0 %v1914
    %v1959 = vpop.f32.mrf.mxu0
    %v1960 = vadd.f32 0.0, %v1959
    %1961 = vdwg.mxu0
    %1962 = vmatpush.msra.mxu0 0.0
    %1963 = vmatpush.msra.mxu0 0.0
    %1964 = vmatpush.msra.mxu0 0.0
    %1965 = vmatpush.msra.mxu0 %v175
    %1966 = vmatpush.msra.mxu0 %v157
    %1967 = vmatpush.msra.mxu0 %v154
    %1968 = vmatpush.msra.mxu0 %v151
    %1969 = vmatpush.msra.mxu0 %v148
    %1970 = vmatpush.msra.mxu0 %v145
    %1971 = vmatpush.msra.mxu0 %v142
    %1972 = vmatpush.msra.mxu0 %v139
    %1973 = vmatpush.msra.mxu0 %v136
    %1974 = vmatpush.msra.mxu0 %v133
    %1975 = vmatpush.msra.mxu0 %v130
    %1976 = vmatpush.msra.mxu0 %v127
    %1977 = vmatpush.msra.mxu0 %v124
    %1978 = vmatmul.f32.gmra.mxu0 %v1911
    %v1979 = vpop.f32.mrf.mxu0
    %v1980 = vadd.f32 0.0, %v1979
    %1981 = vmatmul.f32.gmra.mxu0 %v1914
    %v1982 = vpop.f32.mrf.mxu0
    %v1983 = vadd.f32 0.0, %v1982
    %1984 = vdwg.mxu0
    %v1986 = vsel %vm60, %v1906, 0
    %v1989 = vsel %vm60, %v1907, 0
    %1991 = vmatpush.msra.mxu0 0.0
    %1992 = vmatpush.msra.mxu0 0.0
    %1993 = vmatpush.msra.mxu0 0.0
    %1994 = vmatpush.msra.mxu0 %v253
    %1995 = vmatpush.msra.mxu0 %v113
    %1996 = vmatpush.msra.mxu0 %v110
    %1997 = vmatpush.msra.mxu0 %v107
    %1998 = vmatpush.msra.mxu0 %v104
    %1999 = vmatpush.msra.mxu0 %v101
    %2000 = vmatpush.msra.mxu0 %v98
    %2001 = vmatpush.msra.mxu0 %v95
    %2002 = vmatpush.msra.mxu0 %v92
    %2003 = vmatpush.msra.mxu0 %v89
    %2004 = vmatpush.msra.mxu0 %v86
    %2005 = vmatpush.msra.mxu0 %v83
    %2006 = vmatpush.msra.mxu0 %v80
    %2007 = vmatmul.f32.gmra.mxu0 %v1986
    %v2008 = vpop.f32.mrf.mxu0
    %v2009 = vadd.f32 %v1934, %v2008
    %2010 = vmatmul.f32.gmra.mxu0 %v1989
    %v2011 = vpop.f32.mrf.mxu0
    %v2012 = vadd.f32 %v1937, %v2011
    %2013 = vdwg.mxu0
    %2014 = vmatpush.msra.mxu0 0.0
    %2015 = vmatpush.msra.mxu0 0.0
    %2016 = vmatpush.msra.mxu0 0.0
    %2017 = vmatpush.msra.mxu0 %v256
    %2018 = vmatpush.msra.mxu0 %v114
    %2019 = vmatpush.msra.mxu0 %v111
    %2020 = vmatpush.msra.mxu0 %v108
    %2021 = vmatpush.msra.mxu0 %v105
    %2022 = vmatpush.msra.mxu0 %v102
    %2023 = vmatpush.msra.mxu0 %v99
    %2024 = vmatpush.msra.mxu0 %v96
    %2025 = vmatpush.msra.mxu0 %v93
    %2026 = vmatpush.msra.mxu0 %v90
    %2027 = vmatpush.msra.mxu0 %v87
    %2028 = vmatpush.msra.mxu0 %v84
    %2029 = vmatpush.msra.mxu0 %v81
    %2030 = vmatmul.f32.gmra.mxu0 %v1986
    %v2031 = vpop.f32.mrf.mxu0
    %v2032 = vadd.f32 %v1957, %v2031
    %2033 = vmatmul.f32.gmra.mxu0 %v1989
    %v2034 = vpop.f32.mrf.mxu0
    %v2035 = vadd.f32 %v1960, %v2034
    %2036 = vdwg.mxu0
    %2037 = vmatpush.msra.mxu0 0.0
    %2038 = vmatpush.msra.mxu0 0.0
    %2039 = vmatpush.msra.mxu0 0.0
    %2040 = vmatpush.msra.mxu0 %v259
    %2041 = vmatpush.msra.mxu0 %v115
    %2042 = vmatpush.msra.mxu0 %v112
    %2043 = vmatpush.msra.mxu0 %v109
    %2044 = vmatpush.msra.mxu0 %v106
    %2045 = vmatpush.msra.mxu0 %v103
    %2046 = vmatpush.msra.mxu0 %v100
    %2047 = vmatpush.msra.mxu0 %v97
    %2048 = vmatpush.msra.mxu0 %v94
    %2049 = vmatpush.msra.mxu0 %v91
    %2050 = vmatpush.msra.mxu0 %v88
    %2051 = vmatpush.msra.mxu0 %v85
    %2052 = vmatpush.msra.mxu0 %v82
    %2053 = vmatmul.f32.gmra.mxu0 %v1986
    %v2054 = vpop.f32.mrf.mxu0
    %v2055 = vadd.f32 %v1980, %v2054
    %2056 = vmatmul.f32.gmra.mxu0 %v1989
    %v2057 = vpop.f32.mrf.mxu0
    %v2058 = vadd.f32 %v1983, %v2057
    %2059 = vdwg.mxu0
    %v2060 = vld [vmem:[%s1905 + $0x2] sm:$0xff]
    %v2061 = vld [vmem:[%s1905 + $0xa] sm:$0x1]
    %v2063 = vsel %vm60, %v2060, 0
    %v2066 = vsel %vm60, %v2061, 0
    %2068 = vmatpush.msra.mxu0 0.0
    %2069 = vmatpush.msra.mxu0 0.0
    %2070 = vmatpush.msra.mxu0 0.0
    %2071 = vmatpush.msra.mxu0 %v379
    %2072 = vmatpush.msra.mxu0 %v366
    %2073 = vmatpush.msra.mxu0 %v363
    %2074 = vmatpush.msra.mxu0 %v360
    %2075 = vmatpush.msra.mxu0 %v357
    %2076 = vmatpush.msra.mxu0 %v354
    %2077 = vmatpush.msra.mxu0 %v351
    %2078 = vmatpush.msra.mxu0 %v348
    %2079 = vmatpush.msra.mxu0 %v345
    %2080 = vmatpush.msra.mxu0 %v342
    %2081 = vmatpush.msra.mxu0 %v339
    %2082 = vmatpush.msra.mxu0 %v336
    %2083 = vmatpush.msra.mxu0 %v333
    %2084 = vmatmul.f32.gmra.mxu0 %v2063
    %v2085 = vpop.f32.mrf.mxu0
    %v2086 = vadd.f32 0.0, %v2085
    %2087 = vmatmul.f32.gmra.mxu0 %v2066
    %v2088 = vpop.f32.mrf.mxu0
    %v2089 = vadd.f32 0.0, %v2088
    %2090 = vdwg.mxu0
    %2091 = vmatpush.msra.mxu0 0.0
    %2092 = vmatpush.msra.mxu0 0.0
    %2093 = vmatpush.msra.mxu0 0.0
    %2094 = vmatpush.msra.mxu0 %v382
    %2095 = vmatpush.msra.mxu0 %v367
    %2096 = vmatpush.msra.mxu0 %v364
    %2097 = vmatpush.msra.mxu0 %v361
    %2098 = vmatpush.msra.mxu0 %v358
    %2099 = vmatpush.msra.mxu0 %v355
    %2100 = vmatpush.msra.mxu0 %v352
    %2101 = vmatpush.msra.mxu0 %v349
    %2102 = vmatpush.msra.mxu0 %v346
    %2103 = vmatpush.msra.mxu0 %v343
    %2104 = vmatpush.msra.mxu0 %v340
    %2105 = vmatpush.msra.mxu0 %v337
    %2106 = vmatpush.msra.mxu0 %v334
    %2107 = vmatmul.f32.gmra.mxu0 %v2063
    %v2108 = vpop.f32.mrf.mxu0
    %v2109 = vadd.f32 0.0, %v2108
    %2110 = vmatmul.f32.gmra.mxu0 %v2066
    %v2111 = vpop.f32.mrf.mxu0
    %v2112 = vadd.f32 0.0, %v2111
    %2113 = vdwg.mxu0
    %2114 = vmatpush.msra.mxu0 0.0
    %2115 = vmatpush.msra.mxu0 0.0
    %2116 = vmatpush.msra.mxu0 0.0
    %2117 = vmatpush.msra.mxu0 %v385
    %2118 = vmatpush.msra.mxu0 %v368
    %2119 = vmatpush.msra.mxu0 %v365
    %2120 = vmatpush.msra.mxu0 %v362
    %2121 = vmatpush.msra.mxu0 %v359
    %2122 = vmatpush.msra.mxu0 %v356
    %2123 = vmatpush.msra.mxu0 %v353
    %2124 = vmatpush.msra.mxu0 %v350
    %2125 = vmatpush.msra.mxu0 %v347
    %2126 = vmatpush.msra.mxu0 %v344
    %2127 = vmatpush.msra.mxu0 %v341
    %2128 = vmatpush.msra.mxu0 %v338
    %2129 = vmatpush.msra.mxu0 %v335
    %2130 = vmatmul.f32.gmra.mxu0 %v2063
    %v2131 = vpop.f32.mrf.mxu0
    %v2132 = vadd.f32 0.0, %v2131
    %2133 = vmatmul.f32.gmra.mxu0 %v2066
    %v2134 = vpop.f32.mrf.mxu0
    %v2135 = vadd.f32 0.0, %v2134
    %2136 = vdwg.mxu0
    %v2137 = vadd.f32 %v2009, %v2086
    %v2138 = vadd.f32 %v2032, %v2109
    %v2139 = vadd.f32 %v2055, %v2132
    %v2140 = vadd.f32 %v2012, %v2089
    %v2141 = vadd.f32 %v2035, %v2112
    %v2142 = vadd.f32 %v2058, %v2135
    %v2143 = vld [vmem:[%s1905 + $0x3] sm:$0xff]
    %v2144 = vld [vmem:[%s1905 + $0xb] sm:$0x1]
    %v2146 = vsel %vm60, %v2143, 0
    %v2149 = vsel %vm60, %v2144, 0
    %2151 = vmatpush.msra.mxu0 0.0
    %2152 = vmatpush.msra.mxu0 0.0
    %2153 = vmatpush.msra.mxu0 0.0
    %2154 = vmatpush.msra.mxu0 %v511
    %2155 = vmatpush.msra.mxu0 %v498
    %2156 = vmatpush.msra.mxu0 %v495
    %2157 = vmatpush.msra.mxu0 %v492
    %2158 = vmatpush.msra.mxu0 %v489
    %2159 = vmatpush.msra.mxu0 %v486
    %2160 = vmatpush.msra.mxu0 %v483
    %2161 = vmatpush.msra.mxu0 %v480
    %2162 = vmatpush.msra.mxu0 %v477
    %2163 = vmatpush.msra.mxu0 %v474
    %2164 = vmatpush.msra.mxu0 %v471
    %2165 = vmatpush.msra.mxu0 %v468
    %2166 = vmatpush.msra.mxu0 %v465
    %2167 = vmatmul.f32.gmra.mxu0 %v2146
    %v2168 = vpop.f32.mrf.mxu0
    %v2169 = vadd.f32 0.0, %v2168
    %2170 = vmatmul.f32.gmra.mxu0 %v2149
    %v2171 = vpop.f32.mrf.mxu0
    %v2172 = vadd.f32 0.0, %v2171
    %2173 = vdwg.mxu0
    %2174 = vmatpush.msra.mxu0 0.0
    %2175 = vmatpush.msra.mxu0 0.0
    %2176 = vmatpush.msra.mxu0 0.0
    %2177 = vmatpush.msra.mxu0 %v514
    %2178 = vmatpush.msra.mxu0 %v499
    %2179 = vmatpush.msra.mxu0 %v496
    %2180 = vmatpush.msra.mxu0 %v493
    %2181 = vmatpush.msra.mxu0 %v490
    %2182 = vmatpush.msra.mxu0 %v487
    %2183 = vmatpush.msra.mxu0 %v484
    %2184 = vmatpush.msra.mxu0 %v481
    %2185 = vmatpush.msra.mxu0 %v478
    %2186 = vmatpush.msra.mxu0 %v475
    %2187 = vmatpush.msra.mxu0 %v472
    %2188 = vmatpush.msra.mxu0 %v469
    %2189 = vmatpush.msra.mxu0 %v466
    %2190 = vmatmul.f32.gmra.mxu0 %v2146
    %v2191 = vpop.f32.mrf.mxu0
    %v2192 = vadd.f32 0.0, %v2191
    %2193 = vmatmul.f32.gmra.mxu0 %v2149
    %v2194 = vpop.f32.mrf.mxu0
    %v2195 = vadd.f32 0.0, %v2194
    %2196 = vdwg.mxu0
    %2197 = vmatpush.msra.mxu0 0.0
    %2198 = vmatpush.msra.mxu0 0.0
    %2199 = vmatpush.msra.mxu0 0.0
    %2200 = vmatpush.msra.mxu0 %v517
    %2201 = vmatpush.msra.mxu0 %v500
    %2202 = vmatpush.msra.mxu0 %v497
    %2203 = vmatpush.msra.mxu0 %v494
    %2204 = vmatpush.msra.mxu0 %v491
    %2205 = vmatpush.msra.mxu0 %v488
    %2206 = vmatpush.msra.mxu0 %v485
    %2207 = vmatpush.msra.mxu0 %v482
    %2208 = vmatpush.msra.mxu0 %v479
    %2209 = vmatpush.msra.mxu0 %v476
    %2210 = vmatpush.msra.mxu0 %v473
    %2211 = vmatpush.msra.mxu0 %v470
    %2212 = vmatpush.msra.mxu0 %v467
    %2213 = vmatmul.f32.gmra.mxu0 %v2146
    %v2214 = vpop.f32.mrf.mxu0
    %v2215 = vadd.f32 0.0, %v2214
    %2216 = vmatmul.f32.gmra.mxu0 %v2149
    %v2217 = vpop.f32.mrf.mxu0
    %v2218 = vadd.f32 0.0, %v2217
    %2219 = vdwg.mxu0
    %v2220 = vadd.f32 %v2137, %v2169
    %v2221 = vadd.f32 %v2138, %v2192
    %v2222 = vadd.f32 %v2139, %v2215
    %v2223 = vadd.f32 %v2140, %v2172
    %v2224 = vadd.f32 %v2141, %v2195
    %v2225 = vadd.f32 %v2142, %v2218
    %v2226 = vld [vmem:[%s1905 + $0x4] sm:$0xff]
    %v2227 = vld [vmem:[%s1905 + $0xc] sm:$0x1]
    %v2229 = vsel %vm60, %v2226, 0
    %v2232 = vsel %vm60, %v2227, 0
    %2234 = vmatpush.msra.mxu0 0.0
    %2235 = vmatpush.msra.mxu0 0.0
    %2236 = vmatpush.msra.mxu0 0.0
    %2237 = vmatpush.msra.mxu0 %v643
    %2238 = vmatpush.msra.mxu0 %v630
    %2239 = vmatpush.msra.mxu0 %v627
    %2240 = vmatpush.msra.mxu0 %v624
    %2241 = vmatpush.msra.mxu0 %v621
    %2242 = vmatpush.msra.mxu0 %v618
    %2243 = vmatpush.msra.mxu0 %v615
    %2244 = vmatpush.msra.mxu0 %v612
    %2245 = vmatpush.msra.mxu0 %v609
    %2246 = vmatpush.msra.mxu0 %v606
    %2247 = vmatpush.msra.mxu0 %v603
    %2248 = vmatpush.msra.mxu0 %v600
    %2249 = vmatpush.msra.mxu0 %v597
    %2250 = vmatmul.f32.gmra.mxu0 %v2229
    %v2251 = vpop.f32.mrf.mxu0
    %v2252 = vadd.f32 0.0, %v2251
    %2253 = vmatmul.f32.gmra.mxu0 %v2232
    %v2254 = vpop.f32.mrf.mxu0
    %v2255 = vadd.f32 0.0, %v2254
    %2256 = vdwg.mxu0
    %2257 = vmatpush.msra.mxu0 0.0
    %2258 = vmatpush.msra.mxu0 0.0
    %2259 = vmatpush.msra.mxu0 0.0
    %2260 = vmatpush.msra.mxu0 %v646
    %2261 = vmatpush.msra.mxu0 %v631
    %2262 = vmatpush.msra.mxu0 %v628
    %2263 = vmatpush.msra.mxu0 %v625
    %2264 = vmatpush.msra.mxu0 %v622
    %2265 = vmatpush.msra.mxu0 %v619
    %2266 = vmatpush.msra.mxu0 %v616
    %2267 = vmatpush.msra.mxu0 %v613
    %2268 = vmatpush.msra.mxu0 %v610
    %2269 = vmatpush.msra.mxu0 %v607
    %2270 = vmatpush.msra.mxu0 %v604
    %2271 = vmatpush.msra.mxu0 %v601
    %2272 = vmatpush.msra.mxu0 %v598
    %2273 = vmatmul.f32.gmra.mxu0 %v2229
    %v2274 = vpop.f32.mrf.mxu0
    %v2275 = vadd.f32 0.0, %v2274
    %2276 = vmatmul.f32.gmra.mxu0 %v2232
    %v2277 = vpop.f32.mrf.mxu0
    %v2278 = vadd.f32 0.0, %v2277
    %2279 = vdwg.mxu0
    %2280 = vmatpush.msra.mxu0 0.0
    %2281 = vmatpush.msra.mxu0 0.0
    %2282 = vmatpush.msra.mxu0 0.0
    %2283 = vmatpush.msra.mxu0 %v649
    %2284 = vmatpush.msra.mxu0 %v632
    %2285 = vmatpush.msra.mxu0 %v629
    %2286 = vmatpush.msra.mxu0 %v626
    %2287 = vmatpush.msra.mxu0 %v623
    %2288 = vmatpush.msra.mxu0 %v620
    %2289 = vmatpush.msra.mxu0 %v617
    %2290 = vmatpush.msra.mxu0 %v614
    %2291 = vmatpush.msra.mxu0 %v611
    %2292 = vmatpush.msra.mxu0 %v608
    %2293 = vmatpush.msra.mxu0 %v605
    %2294 = vmatpush.msra.mxu0 %v602
    %2295 = vmatpush.msra.mxu0 %v599
    %2296 = vmatmul.f32.gmra.mxu0 %v2229
    %v2297 = vpop.f32.mrf.mxu0
    %v2298 = vadd.f32 0.0, %v2297
    %2299 = vmatmul.f32.gmra.mxu0 %v2232
    %v2300 = vpop.f32.mrf.mxu0
    %v2301 = vadd.f32 0.0, %v2300
    %2302 = vdwg.mxu0
    %v2303 = vadd.f32 %v2220, %v2252
    %v2304 = vadd.f32 %v2221, %v2275
    %v2305 = vadd.f32 %v2222, %v2298
    %v2306 = vadd.f32 %v2223, %v2255
    %v2307 = vadd.f32 %v2224, %v2278
    %v2308 = vadd.f32 %v2225, %v2301
    %v2309 = vld [vmem:[%s1905 + $0x5] sm:$0xff]
    %v2310 = vld [vmem:[%s1905 + $0xd] sm:$0x1]
    %v2312 = vsel %vm60, %v2309, 0
    %v2315 = vsel %vm60, %v2310, 0
    %2317 = vmatpush.msra.mxu0 0.0
    %2318 = vmatpush.msra.mxu0 0.0
    %2319 = vmatpush.msra.mxu0 0.0
    %2320 = vmatpush.msra.mxu0 %v775
    %2321 = vmatpush.msra.mxu0 %v762
    %2322 = vmatpush.msra.mxu0 %v759
    %2323 = vmatpush.msra.mxu0 %v756
    %2324 = vmatpush.msra.mxu0 %v753
    %2325 = vmatpush.msra.mxu0 %v750
    %2326 = vmatpush.msra.mxu0 %v747
    %2327 = vmatpush.msra.mxu0 %v744
    %2328 = vmatpush.msra.mxu0 %v741
    %2329 = vmatpush.msra.mxu0 %v738
    %2330 = vmatpush.msra.mxu0 %v735
    %2331 = vmatpush.msra.mxu0 %v732
    %2332 = vmatpush.msra.mxu0 %v729
    %2333 = vmatmul.f32.gmra.mxu0 %v2312
    %v2334 = vpop.f32.mrf.mxu0
    %v2335 = vadd.f32 0.0, %v2334
    %2336 = vmatmul.f32.gmra.mxu0 %v2315
    %v2337 = vpop.f32.mrf.mxu0
    %v2338 = vadd.f32 0.0, %v2337
    %2339 = vdwg.mxu0
    %2340 = vmatpush.msra.mxu0 0.0
    %2341 = vmatpush.msra.mxu0 0.0
    %2342 = vmatpush.msra.mxu0 0.0
    %2343 = vmatpush.msra.mxu0 %v778
    %2344 = vmatpush.msra.mxu0 %v763
    %2345 = vmatpush.msra.mxu0 %v760
    %2346 = vmatpush.msra.mxu0 %v757
    %2347 = vmatpush.msra.mxu0 %v754
    %2348 = vmatpush.msra.mxu0 %v751
    %2349 = vmatpush.msra.mxu0 %v748
    %2350 = vmatpush.msra.mxu0 %v745
    %2351 = vmatpush.msra.mxu0 %v742
    %2352 = vmatpush.msra.mxu0 %v739
    %2353 = vmatpush.msra.mxu0 %v736
    %2354 = vmatpush.msra.mxu0 %v733
    %2355 = vmatpush.msra.mxu0 %v730
    %2356 = vmatmul.f32.gmra.mxu0 %v2312
    %v2357 = vpop.f32.mrf.mxu0
    %v2358 = vadd.f32 0.0, %v2357
    %2359 = vmatmul.f32.gmra.mxu0 %v2315
    %v2360 = vpop.f32.mrf.mxu0
    %v2361 = vadd.f32 0.0, %v2360
    %2362 = vdwg.mxu0
    %2363 = vmatpush.msra.mxu0 0.0
    %2364 = vmatpush.msra.mxu0 0.0
    %2365 = vmatpush.msra.mxu0 0.0
    %2366 = vmatpush.msra.mxu0 %v781
    %2367 = vmatpush.msra.mxu0 %v764
    %2368 = vmatpush.msra.mxu0 %v761
    %2369 = vmatpush.msra.mxu0 %v758
    %2370 = vmatpush.msra.mxu0 %v755
    %2371 = vmatpush.msra.mxu0 %v752
    %2372 = vmatpush.msra.mxu0 %v749
    %2373 = vmatpush.msra.mxu0 %v746
    %2374 = vmatpush.msra.mxu0 %v743
    %2375 = vmatpush.msra.mxu0 %v740
    %2376 = vmatpush.msra.mxu0 %v737
    %2377 = vmatpush.msra.mxu0 %v734
    %2378 = vmatpush.msra.mxu0 %v731
    %2379 = vmatmul.f32.gmra.mxu0 %v2312
    %v2380 = vpop.f32.mrf.mxu0
    %v2381 = vadd.f32 0.0, %v2380
    %2382 = vmatmul.f32.gmra.mxu0 %v2315
    %v2383 = vpop.f32.mrf.mxu0
    %v2384 = vadd.f32 0.0, %v2383
    %2385 = vdwg.mxu0
    %v2386 = vadd.f32 %v2303, %v2335
    %v2387 = vadd.f32 %v2304, %v2358
    %v2388 = vadd.f32 %v2305, %v2381
    %v2389 = vadd.f32 %v2306, %v2338
    %v2390 = vadd.f32 %v2307, %v2361
    %v2391 = vadd.f32 %v2308, %v2384
    %v2392 = vsel %vm858, %v2389, -inf
    %v2393 = vmax.f32 %v2386, %v2392
    %v2394 = vrot.slane %v2393, 4
    %v2395 = vmax.f32 %v2393, %v2394
    %v2396 = vrot.slane %v2395, 2
    %v2397 = vmax.f32 %v2395, %v2396
    %v2398 = vrot.slane %v2397, 1
    %v2399 = vmax.f32 %v2397, %v2398
    %v2400 = vsel %vm858, %v2390, -inf
    %v2401 = vmax.f32 %v2387, %v2400
    %v2402 = vrot.slane %v2401, 4
    %v2403 = vmax.f32 %v2401, %v2402
    %v2404 = vrot.slane %v2403, 2
    %v2405 = vmax.f32 %v2403, %v2404
    %v2406 = vrot.slane %v2405, 1
    %v2407 = vmax.f32 %v2405, %v2406
    %v2408 = vsel %vm858, %v2391, -inf
    %v2409 = vmax.f32 %v2388, %v2408
    %v2410 = vrot.slane %v2409, 4
    %v2411 = vmax.f32 %v2409, %v2410
    %v2412 = vrot.slane %v2411, 2
    %v2413 = vmax.f32 %v2411, %v2412
    %v2414 = vrot.slane %v2413, 1
    %v2415 = vmax.f32 %v2413, %v2414
    %v2416 = vsel %vm858, %v866, %v1377
    %v2417 = vsel %vm858, %v874, %v1385
    %v2418 = vsel %vm858, %v882, %v1393
    %vm2419 = vcmask 1041408
    %v2420 = vsel %vm2419, %v2416, %v1888
    %v2421 = vsel %vm2419, %v2417, %v1896
    %v2422 = vsel %vm2419, %v2418, %v1904
    %vm2423 = vcmask 1042432
    %v2424 = vsel %vm2423, %v2420, %v2399
    %v2425 = vsel %vm2423, %v2421, %v2407
    %v2426 = vsel %vm2423, %v2422, %v2415
    %v2427 = vld [vmem:[#allocation8] sm:$0x7]
    %v2429 = vperm.slane %v2427, 0
    %v2430 = vperm.slane %v2427, 1
    %v2431 = vperm.slane %v2427, 2
    %v2435 = vadd.f32 %v2424, %v2429
    %v2436 = vadd.f32 %v2425, %v2430
    %v2437 = vadd.f32 %v2426, %v2431
    %v2438 = vmax.f32 %v2435, 0.0
    %v2439 = vmax.f32 %v2436, 0.0
    %v2440 = vmax.f32 %v2437, 0.0
    %v2443 = vrot.slane %v2439, 4
    %v2444 = vsel %vm167, %v2438, %v2443
    %2446 = vst [vmem:[#allocation9] sm:$0xff] %v2444
    %2447 = vst [vmem:[#allocation9 + $0x8] sm:$0xf] %v2440
    // Predicated region
    $region26: #{tpu_custom_call.1} parent=1 // pred_check
      _
    $region27: #{tpu_custom_call.1} parent=1 // pred_check_branch
      %2449 = sbr.rel (0) target = $region29
    $region28: #{tpu_custom_call.1} parent=1 // pred_region
      %2451 = vsyncadd [#allocation5], 0
      %s2453 = sshll.u32 [#allocation9], 4
      %s2454 = int_to_ptr.vmem [resolvable:$true] %s2453
      %s2455 = sshll.u32 %s3, 4
      %s2456 = int_to_ptr.hbm [resolvable:$true] %s2455
      %2458 = dma.vmem_to_hbm [thread:$0]  %s2454, 192, %s2456, [#allocation5]
    $region29: #{tpu_custom_call.1} parent=1 // pred_fallthru
      _
    // Predicated region
    $region30: #{tpu_custom_call.1} parent=1 // pred_check
      _
    $region31: #{tpu_custom_call.1} parent=1 // pred_check_branch
      %2460 = sbr.rel (0) target = $region33
    $region32: #{tpu_custom_call.1} parent=1 // pred_region
      %2462 = dma.done [#allocation5], 192
    $region33: #{tpu_custom_call.1} parent=1 // pred_fallthru
      _
    %2463 = vsyncpa [#allocation4], 1
    %2464 = vsyncpa [#allocation7], 1
    %2465 = vsyncpa [#allocation5], 1

</llo_original>
